<compile_context>
chip_gen: v7x
topology: tpu7x:2x2x1
jax: 0.10.0
libtpu: 0.0.40
codegen_flags: <defaults>
</compile_context>

<pallas_src>
import functools

import numpy as np
import jax
import jax.numpy as jnp
from jax import lax
from jax.experimental import pallas as pl
from jax.experimental.pallas import tpu as pltpu


def _round_up(x: int, m: int) -> int:
    return ((x + m - 1) // m) * m


@functools.lru_cache(maxsize=None)
def _haar_col_filter(W: int):
    """(W, W) f32 horizontal Haar filter C.

    For a row vector v of length W (already vertically combined),
      (v @ C)[j]        = 0.5 * (v[2j] + v[2j+1])   -> "sum"  columns [0:W2)
      (v @ C)[W2 + j]   = 0.5 * (v[2j+1] - v[2j])   -> "diff" columns [W2:W)
    so  P = top+bottom  gives [LL | LH]  and  Q = bottom-top gives [HL | HH],
    matching get_wav_two()'s depthwise 2x2 / stride-2 convolutions exactly.
    Cached per W so it is built and uploaded to device only once.
    """
    W2 = W // 2
    C = np.zeros((W, W), dtype=np.float32)
    j = np.arange(W2)
    C[2 * j, j] = 0.5
    C[2 * j + 1, j] = 0.5
    C[2 * j, W2 + j] = -0.5
    C[2 * j + 1, W2 + j] = 0.5
    return jnp.asarray(C)


def _wavepool_kernel(c_ref, x_ref, ll_ref, lh_ref, hl_ref, hh_ref, *, precision):
    # x_ref: (tr, 2*W) tile of row-pairs [top | bottom]; c_ref: (W, W) constant +/-0.5 filter
    # (same block every grid step -> stays resident, no re-DMA).
    two_w = x_ref.shape[-1]
    W = two_w // 2
    W2 = W // 2

    xt = x_ref[...].astype(jnp.float32)     # in-kernel cast: free under the DMA
    top = xt[:, :W]                         # contiguous lane slices -> cheap VPU ops
    bot = xt[:, W:]
    p = top + bot                           # vertical low-pass  (exact f32, VPU)
    q = bot - top                           # vertical high-pass (exact f32, VPU)

    c = c_ref[...]
    # Horizontal even/odd compress + (sum|diff) fused into one MXU matmul per branch.
    # Output width is W (=2*W2), twice the old per-band width; total MACs are half the old kernel.
    pr = jnp.dot(p, c, preferred_element_type=jnp.float32, precision=precision)  # [LL | LH]
    qr = jnp.dot(q, c, preferred_element_type=jnp.float32, precision=precision)  # [HL | HH]

    ll_ref[...] = pr[:, :W2].astype(ll_ref.dtype)
    lh_ref[...] = pr[:, W2:].astype(lh_ref.dtype)
    hl_ref[...] = qr[:, :W2].astype(hl_ref.dtype)
    hh_ref[...] = qr[:, W2:].astype(hh_ref.dtype)
    # NOTE: for W < 256 (W2 < 128) these four stores are masked (sub-128 lanes). A fused
    # (tr, 2*W) lane-dense output + wrapper slice would remove that at the cost of one extra
    # HBM pass over the outputs; only worth it in the small-image regime.


@functools.partial(jax.jit, static_argnames=("precision",))
def wavepool2(x, *, precision=lax.Precision.HIGHEST):
    """x: (N, C, H, W) float -> (LL, LH, HL, HH), each (N, C, H//2, W//2), dtype of x."""
    N, C, H, W = x.shape
    assert H % 2 == 0 and W % 2 == 0, "WavePool2 requires even H and W (stride-2 2x2 conv)"
    H2, W2 = H // 2, W // 2
    R = N * C * H2                               # one kernel row per output image row

    filt = _haar_col_filter(W)                   # built/uploaded once per W (lru_cache)

    # Free (metadata-only) reshape: row r = (n, c, i) holds [x[n,c,2i,:], x[n,c,2i+1,:]].
    xr = x.reshape(R, 2 * W)

    # --- adaptive row tiling -------------------------------------------------------------
    # ~1 MiB streamed input tile keeps per-step overhead amortized (>=85% of HBM roofline)
    # without blowing the scoped VMEM limit at large W.
    target_rows = max(8, (1 << 20) // (8 * W))
    tr = min(R, target_rows)
    if tr == R and R >= 16:
        # Force >= 2 grid steps so v7x's two TensorCores both get work on mid-sized inputs.
        tr = _round_up(pl.cdiv(R, 2), 8)
    if tr < R:
        tr = max(8, (tr // 8) * 8)               # sublane (8) alignment when actually tiling
    grid = (pl.cdiv(R, tr),)                     # partial last block handled by Pallas masking

    # --- explicit scoped-VMEM budget -----------------------------------------------------
    itemsize = 4
    in_tile_b = tr * 2 * W * itemsize            # streamed row-pair tile
    out_tile_b = 4 * tr * W2 * itemsize          # four band tiles
    filt_b = W * W * itemsize                    # resident constant filter
    tmp_b = 4 * tr * W * itemsize                # p, q, pr, qr temporaries
    vmem_limit = 2 * in_tile_b + 2 * out_tile_b + 2 * filt_b + tmp_b + (8 << 20)
    vmem_limit = int(min(max(vmem_limit, 16 << 20), 64 << 20))
    # TODO(synk): for W >~ 1536 the O(W^2) filter still dominates VMEM; single-buffer it
    # (pipeline_mode=pl.Buffered(1)) or add a column-tiled grid axis with a block-diagonal filter.

    out_sd = jax.ShapeDtypeStruct((R, W2), x.dtype)
    flops = 2 * 2 * R * W * W + 2 * R * W        # two (tr,W)@(W,W) matmuls + VPU combines
    bytes_accessed = (2 * x.size + W * W) * itemsize
    cost = pl.CostEstimate(flops=flops, transcendentals=0, bytes_accessed=bytes_accessed)

    kern = functools.partial(_wavepool_kernel, precision=precision)
    ll, lh, hl, hh = pl.pallas_call(
        kern,
        out_shape=(out_sd, out_sd, out_sd, out_sd),
        grid=grid,
        in_specs=[
            # Constant filter: same block every step -> resident in VMEM, no per-step DMA.
            pl.BlockSpec((W, W), lambda i: (0, 0)),
            # Streaming row-pair tiles, double-buffered by the Pallas pipeline.
            pl.BlockSpec((tr, 2 * W), lambda i: (i, 0)),
        ],
        out_specs=tuple(pl.BlockSpec((tr, W2), lambda i: (i, 0)) for _ in range(4)),
        compiler_params=pltpu.CompilerParams(
            dimension_semantics=("parallel",),
            vmem_limit_bytes=vmem_limit,
        ),
        cost_estimate=cost,
    )(filt, xr)

    shape = (N, C, H2, W2)
    return (ll.reshape(shape), lh.reshape(shape),
            hl.reshape(shape), hh.reshape(shape))


class WavePool2:
    """Thin functional mirror of the PyTorch module (depthwise Haar taps are channel-independent)."""

    def __init__(self, in_channels):
        self.in_channels = in_channels

    def __call__(self, x):
        return wavepool2(x)


def _reference(x):
    """Plain-JAX reference identical to the PyTorch depthwise-conv semantics."""
    a = x[:, :, 0::2, 0::2]
    b = x[:, :, 0::2, 1::2]
    c = x[:, :, 1::2, 0::2]
    d = x[:, :, 1::2, 1::2]
    ll = 0.5 * (a + b + c + d)
    lh = 0.5 * (-a + b - c + d)
    hl = 0.5 * (-a - b + c + d)
    hh = 0.5 * (a - b - c + d)
    return ll, lh, hl, hh


if __name__ == "__main__":
    key = jax.random.PRNGKey(0)

    # Case 1: module-sized input (grid is forced to 2 even steps -> exercises the tiled path and
    # the megacore 'parallel' sharding).  Case 2: R=60, tr=32 -> partial last block + masking.
    test_shapes = [(2, 4, 16, 16), (2, 3, 20, 24)]

    for shp in test_shapes:
        key, sub = jax.random.split(key)
        x = jax.random.normal(sub, shp, dtype=jnp.float32)

        outs = jax.block_until_ready(wavepool2(x))
        refs = _reference(x)
        for o, r in zip(outs, refs):
            np.testing.assert_allclose(np.asarray(o), np.asarray(r), rtol=1e-5, atol=1e-5)

    print("KERNEL_OK")
</pallas_src>

<mosaic_0001>
module attributes {stable_mosaic.version = 11 : i64} {
  func.func @_wavepool_kernel(%arg0: i32, %arg1: memref<16x16xf32, #tpu.memory_space<vmem>>, %arg2: memref<32x32xf32, #tpu.memory_space<vmem>>, %arg3: memref<32x8xf32, #tpu.memory_space<vmem>>, %arg4: memref<32x8xf32, #tpu.memory_space<vmem>>, %arg5: memref<32x8xf32, #tpu.memory_space<vmem>>, %arg6: memref<32x8xf32, #tpu.memory_space<vmem>>) attributes {dimension_semantics = [#tpu.dimension_semantics<parallel>], iteration_bounds = array<i64: 2>, scalar_prefetch = 0 : i64, scratch_operands = 0 : i64, tpu.core_type = #tpu.core_type<tc>, window_params = [{pipeline_mode = #tpu.pipeline_mode<synchronous>, transform_indices = @transform_0, window_bounds = array<i64: 16, 16>}, {transform_indices = @transform_1, window_bounds = array<i64: 32, 32>}, {transform_indices = @transform_2, window_bounds = array<i64: 32, 8>}, {transform_indices = @transform_3, window_bounds = array<i64: 32, 8>}, {transform_indices = @transform_4, window_bounds = array<i64: 32, 8>}, {transform_indices = @transform_5, window_bounds = array<i64: 32, 8>}]} {
    %c0 = arith.constant 0 : index
    %c0_0 = arith.constant 0 : index
    %0 = vector.load %arg2[%c0, %c0_0] : memref<32x32xf32, #tpu.memory_space<vmem>>, vector<32x32xf32>
    %1 = vector.extract_strided_slice %0 {offsets = [0, 0], sizes = [32, 16], strides = [1, 1]} : vector<32x32xf32> to vector<32x16xf32>
    %2 = vector.extract_strided_slice %0 {offsets = [0, 16], sizes = [32, 16], strides = [1, 1]} : vector<32x32xf32> to vector<32x16xf32>
    %3 = arith.addf %1, %2 : vector<32x16xf32>
    %4 = arith.subf %2, %1 : vector<32x16xf32>
    %c0_1 = arith.constant 0 : index
    %c0_2 = arith.constant 0 : index
    %5 = vector.load %arg1[%c0_1, %c0_2] : memref<16x16xf32, #tpu.memory_space<vmem>>, vector<16x16xf32>
    %cst = arith.constant dense<0.000000e+00> : vector<32x16xf32>
    %6 = tpu.matmul %3, %5, %cst {dimension_numbers = #tpu.dot_dimension_numbers<[1], [0], [0], [1], [0, 0, 1, 1], [], []>, precision = #tpu.contract_precision<fp32>} : vector<32x16xf32>, vector<16x16xf32>, vector<32x16xf32> -> vector<32x16xf32>
    %cst_3 = arith.constant dense<0.000000e+00> : vector<32x16xf32>
    %7 = tpu.matmul %4, %5, %cst_3 {dimension_numbers = #tpu.dot_dimension_numbers<[1], [0], [0], [1], [0, 0, 1, 1], [], []>, precision = #tpu.contract_precision<fp32>} : vector<32x16xf32>, vector<16x16xf32>, vector<32x16xf32> -> vector<32x16xf32>
    %8 = vector.extract_strided_slice %6 {offsets = [0, 0], sizes = [32, 8], strides = [1, 1]} : vector<32x16xf32> to vector<32x8xf32>
    %c0_4 = arith.constant 0 : index
    %c0_5 = arith.constant 0 : index
    %9 = vector.load %arg3[%c0_4, %c0_5] : memref<32x8xf32, #tpu.memory_space<vmem>>, vector<32x8xf32>
    tpu.vector_store %arg3[%c0_4, %c0_5], %8 {strides = array<i32>} : memref<32x8xf32, #tpu.memory_space<vmem>>, vector<32x8xf32>,
    %10 = vector.extract_strided_slice %6 {offsets = [0, 8], sizes = [32, 8], strides = [1, 1]} : vector<32x16xf32> to vector<32x8xf32>
    %c0_6 = arith.constant 0 : index
    %c0_7 = arith.constant 0 : index
    %11 = vector.load %arg4[%c0_6, %c0_7] : memref<32x8xf32, #tpu.memory_space<vmem>>, vector<32x8xf32>
    tpu.vector_store %arg4[%c0_6, %c0_7], %10 {strides = array<i32>} : memref<32x8xf32, #tpu.memory_space<vmem>>, vector<32x8xf32>,
    %12 = vector.extract_strided_slice %7 {offsets = [0, 0], sizes = [32, 8], strides = [1, 1]} : vector<32x16xf32> to vector<32x8xf32>
    %c0_8 = arith.constant 0 : index
    %c0_9 = arith.constant 0 : index
    %13 = vector.load %arg5[%c0_8, %c0_9] : memref<32x8xf32, #tpu.memory_space<vmem>>, vector<32x8xf32>
    tpu.vector_store %arg5[%c0_8, %c0_9], %12 {strides = array<i32>} : memref<32x8xf32, #tpu.memory_space<vmem>>, vector<32x8xf32>,
    %14 = vector.extract_strided_slice %7 {offsets = [0, 8], sizes = [32, 8], strides = [1, 1]} : vector<32x16xf32> to vector<32x8xf32>
    %c0_10 = arith.constant 0 : index
    %c0_11 = arith.constant 0 : index
    %15 = vector.load %arg6[%c0_10, %c0_11] : memref<32x8xf32, #tpu.memory_space<vmem>>, vector<32x8xf32>
    tpu.vector_store %arg6[%c0_10, %c0_11], %14 {strides = array<i32>} : memref<32x8xf32, #tpu.memory_space<vmem>>, vector<32x8xf32>,
    return
  }
  func.func @transform_0(%arg0: i32) -> (i32, i32) {
    %c0_i32 = arith.constant 0 : i32
    %c0_i32_0 = arith.constant 0 : i32
    %c0_i32_1 = arith.constant 0 : i32
    return %c0_i32, %c0_i32_0 : i32, i32
  }
  func.func @transform_1(%arg0: i32) -> (i32, i32) {
    %c0_i32 = arith.constant 0 : i32
    %c0_i32_0 = arith.constant 0 : i32
    return %arg0, %c0_i32 : i32, i32
  }
  func.func @transform_2(%arg0: i32) -> (i32, i32) {
    %c0_i32 = arith.constant 0 : i32
    %c0_i32_0 = arith.constant 0 : i32
    return %arg0, %c0_i32 : i32, i32
  }
  func.func @transform_3(%arg0: i32) -> (i32, i32) {
    %c0_i32 = arith.constant 0 : i32
    %c0_i32_0 = arith.constant 0 : i32
    return %arg0, %c0_i32 : i32, i32
  }
  func.func @transform_4(%arg0: i32) -> (i32, i32) {
    %c0_i32 = arith.constant 0 : i32
    %c0_i32_0 = arith.constant 0 : i32
    return %arg0, %c0_i32 : i32, i32
  }
  func.func @transform_5(%arg0: i32) -> (i32, i32) {
    %c0_i32 = arith.constant 0 : i32
    %c0_i32_0 = arith.constant 0 : i32
    return %arg0, %c0_i32 : i32, i32
  }
}

</mosaic_0001>

<llo_original>
// kernel: wavepool2.1
$region0: #{wavepool2.1}
  #allocation0 [shape = 'u32[]', space=smem, size = 0x4, offset = 0x4, fixed_abs, tag = 'smem constant byte address 0x4 - core index']
  #allocation1 [shape = 'u32[144,128]{1,0:T(1,128)}', space=vmem, size = 0x12000, scoped, tag = 'internal scratch']
  %s0 = inlined_call_operand.vmem [shape: f32[16,16], index: 0, kind: input, shape index: {}]
  %s1 = inlined_call_operand.vmem [shape: f32[64,32], index: 1, kind: input, shape index: {}]
  %s2 = inlined_call_operand.hbm [shape: f32[64,8], index: 2, kind: output, shape index: {0}]
  %s3 = inlined_call_operand.hbm [shape: f32[64,8], index: 3, kind: output, shape index: {1}]
  %s4 = inlined_call_operand.hbm [shape: f32[64,8], index: 4, kind: output, shape index: {2}]
  %s5 = inlined_call_operand.hbm [shape: f32[64,8], index: 5, kind: output, shape index: {3}]
  %6 = xla_tuple %s2, %s3, %s4, %s5
  %s7 = sld [smem:[#allocation0]]
  $region65: #{wavepool2.1} parent=0
    _
  %s9 = ssub.s32 1, %s7
  %s10 = scalar_select 0, %s9, %s7
  $region1: #{wavepool2.1} parent=0
    #allocation2 [shape = 'u8[32768]{0}', space=vmem, size = 0x8000, scoped, tag = 'output window, operand 0']
    #allocation3 [shape = 's32[2]{0}', space=sflag, size = 0x8, scoped, tag = 'scoped memory for wavepool2.1']
    #allocation4 [shape = 'u8[32768]{0}', space=vmem, size = 0x8000, scoped, tag = 'output window, operand 1']
    #allocation5 [shape = 's32[2]{0}', space=sflag, size = 0x8, scoped, tag = 'scoped memory for wavepool2.1']
    #allocation6 [shape = 'u8[32768]{0}', space=vmem, size = 0x8000, scoped, tag = 'output window, operand 2']
    #allocation7 [shape = 'u8[32768]{0}', space=vmem, size = 0x8000, scoped, tag = 'output window, operand 3']
    #allocation8 [shape = 's32[2]{0}', space=sflag, size = 0x8, scoped, tag = 'scoped memory for wavepool2.1']
    %11 = vsyncpa [#allocation3], 0
    %s12 = scalar_lea.sflag [#allocation3], 1
    %13 = vsyncpa %s12, 0
    %14 = vsyncpa [#allocation5], 0
    %s15 = scalar_lea.sflag [#allocation5], 1
    %16 = vsyncpa %s15, 0
    %17 = vsyncpa [#allocation8], 0
    %s18 = scalar_lea.sflag [#allocation8], 1
    %19 = vsyncpa %s18, 0
    loop: start=0, step=1, limit=4
    $region2: #{wavepool2.1} parent=1 // loop_pre_header
      _
    $region3: #{wavepool2.1} parent=1 // loop_header
      %s21 = sphi 0, %s25
      %p22 = scmp.ge.s32.totalorder %s21, 4
      %s29 = sphi 0, %s29
      %s31 = sphi 0, %s29
      %s32 = sphi 0, %s31
      %s46 = sphi 0, %s32
      %s52 = sphi 0, %s54
      %s55 = sphi 0, %s52
      %s56 = sphi 0, %s55
      %s72 = sphi 0, %s56
      %s78 = sphi 0, %s80
      %s81 = sphi 0, %s78
      %s82 = sphi 0, %s81
      %s98 = sphi 0, %s82
      %s104 = sphi 0, %s106
      %s107 = sphi 0, %s104
      %s108 = sphi 0, %s107
      %s124 = sphi 0, %s108
      %s130 = sphi 0, %s132
      %s133 = sphi 0, %s130
      %s134 = sphi 0, %s133
      %s150 = sphi 0, %s134
      %s156 = sphi 0, %s158
      %s159 = sphi 0, %s156
      %s160 = sphi 0, %s159
      %s176 = sphi 0, %s160
    $region4: #{wavepool2.1} parent=1 // loop_header_branch
      %24 = sbr.rel (%p22) target = $region8
    $region5: #{wavepool2.1} parent=1 // loop_body
      %s26 = ssub.s32 %s21, 1
      %s27 = ssub.s32 %s21, 2
      %s28 = sadd.s32 %s21, 1
      %s30 = sadd.s32 %s29, 1
      %p33 = scmp.eq.s32.totalorder %s21, 1
      %p34 = scmp.ne.s32.totalorder %s29, %s31
      %p35 = scmp.eq.s32.totalorder %s21, 0
      %p36 = por %p34, %p35
      %p37 = scmp.ne.s32.totalorder %s29, %s31
      %p38 = scmp.eq.s32.totalorder %s26, 1
      %p39 = por %p37, %p38
      %p40 = scmp.ne.s32.totalorder %s31, %s32
      %p41 = scmp.eq.s32.totalorder %s26, 0
      %p42 = por %p40, %p41
      %p43 = scmp.ne.s32.totalorder %s31, %s32
      %p44 = scmp.eq.s32.totalorder %s27, 1
      %p45 = por %p43, %p44
      %p47 = scmp.ne.s32.totalorder %s32, %s46
      %p48 = scmp.eq.s32.totalorder %s27, 0
      %p49 = por %p47, %p48
      %s50 = ssub.s32 %s21, %s28
      %p51 = scmp.eq.s32.totalorder %s50, 0
      %s53 = sadd.s32 %s52, 1
      %s54 = scalar_select %p51, %s52, %s53
      %p57 = pneg %p51
      %p58 = scmp.eq.s32.totalorder %s21, 1
      %p59 = por %p57, %p58
      %p60 = scmp.ne.s32.totalorder %s52, %s55
      %p61 = scmp.eq.s32.totalorder %s21, 0
      %p62 = por %p60, %p61
      %p63 = scmp.ne.s32.totalorder %s52, %s55
      %p64 = scmp.eq.s32.totalorder %s26, 1
      %p65 = por %p63, %p64
      %p66 = scmp.ne.s32.totalorder %s55, %s56
      %p67 = scmp.eq.s32.totalorder %s26, 0
      %p68 = por %p66, %p67
      %p69 = scmp.ne.s32.totalorder %s55, %s56
      %p70 = scmp.eq.s32.totalorder %s27, 1
      %p71 = por %p69, %p70
      %p73 = scmp.ne.s32.totalorder %s56, %s72
      %p74 = scmp.eq.s32.totalorder %s27, 0
      %p75 = por %p73, %p74
      %s76 = ssub.s32 %s21, %s28
      %p77 = scmp.eq.s32.totalorder %s76, 0
      %s79 = sadd.s32 %s78, 1
      %s80 = scalar_select %p77, %s78, %s79
      %p83 = pneg %p77
      %p84 = scmp.eq.s32.totalorder %s21, 1
      %p85 = por %p83, %p84
      %p86 = scmp.ne.s32.totalorder %s78, %s81
      %p87 = scmp.eq.s32.totalorder %s21, 0
      %p88 = por %p86, %p87
      %p89 = scmp.ne.s32.totalorder %s78, %s81
      %p90 = scmp.eq.s32.totalorder %s26, 1
      %p91 = por %p89, %p90
      %p92 = scmp.ne.s32.totalorder %s81, %s82
      %p93 = scmp.eq.s32.totalorder %s26, 0
      %p94 = por %p92, %p93
      %p95 = scmp.ne.s32.totalorder %s81, %s82
      %p96 = scmp.eq.s32.totalorder %s27, 1
      %p97 = por %p95, %p96
      %p99 = scmp.ne.s32.totalorder %s82, %s98
      %p100 = scmp.eq.s32.totalorder %s27, 0
      %p101 = por %p99, %p100
      %s102 = ssub.s32 %s21, %s28
      %p103 = scmp.eq.s32.totalorder %s102, 0
      %s105 = sadd.s32 %s104, 1
      %s106 = scalar_select %p103, %s104, %s105
      %p109 = pneg %p103
      %p110 = scmp.eq.s32.totalorder %s21, 1
      %p111 = por %p109, %p110
      %p112 = scmp.ne.s32.totalorder %s104, %s107
      %p113 = scmp.eq.s32.totalorder %s21, 0
      %p114 = por %p112, %p113
      %p115 = scmp.ne.s32.totalorder %s104, %s107
      %p116 = scmp.eq.s32.totalorder %s26, 1
      %p117 = por %p115, %p116
      %p118 = scmp.ne.s32.totalorder %s107, %s108
      %p119 = scmp.eq.s32.totalorder %s26, 0
      %p120 = por %p118, %p119
      %p121 = scmp.ne.s32.totalorder %s107, %s108
      %p122 = scmp.eq.s32.totalorder %s27, 1
      %p123 = por %p121, %p122
      %p125 = scmp.ne.s32.totalorder %s108, %s124
      %p126 = scmp.eq.s32.totalorder %s27, 0
      %p127 = por %p125, %p126
      %s128 = ssub.s32 %s21, %s28
      %p129 = scmp.eq.s32.totalorder %s128, 0
      %s131 = sadd.s32 %s130, 1
      %s132 = scalar_select %p129, %s130, %s131
      %p135 = pneg %p129
      %p136 = scmp.eq.s32.totalorder %s21, 1
      %p137 = por %p135, %p136
      %p138 = scmp.ne.s32.totalorder %s130, %s133
      %p139 = scmp.eq.s32.totalorder %s21, 0
      %p140 = por %p138, %p139
      %p141 = scmp.ne.s32.totalorder %s130, %s133
      %p142 = scmp.eq.s32.totalorder %s26, 1
      %p143 = por %p141, %p142
      %p144 = scmp.ne.s32.totalorder %s133, %s134
      %p145 = scmp.eq.s32.totalorder %s26, 0
      %p146 = por %p144, %p145
      %p147 = scmp.ne.s32.totalorder %s133, %s134
      %p148 = scmp.eq.s32.totalorder %s27, 1
      %p149 = por %p147, %p148
      %p151 = scmp.ne.s32.totalorder %s134, %s150
      %p152 = scmp.eq.s32.totalorder %s27, 0
      %p153 = por %p151, %p152
      %s154 = ssub.s32 %s21, %s28
      %p155 = scmp.eq.s32.totalorder %s154, 0
      %s157 = sadd.s32 %s156, 1
      %s158 = scalar_select %p155, %s156, %s157
      %p161 = pneg %p155
      %p162 = scmp.eq.s32.totalorder %s21, 1
      %p163 = por %p161, %p162
      %p164 = scmp.ne.s32.totalorder %s156, %s159
      %p165 = scmp.eq.s32.totalorder %s21, 0
      %p166 = por %p164, %p165
      %p167 = scmp.ne.s32.totalorder %s156, %s159
      %p168 = scmp.eq.s32.totalorder %s26, 1
      %p169 = por %p167, %p168
      %p170 = scmp.ne.s32.totalorder %s159, %s160
      %p171 = scmp.eq.s32.totalorder %s26, 0
      %p172 = por %p170, %p171
      %p173 = scmp.ne.s32.totalorder %s159, %s160
      %p174 = scmp.eq.s32.totalorder %s27, 1
      %p175 = por %p173, %p174
      %p177 = scmp.ne.s32.totalorder %s160, %s176
      %p178 = scmp.eq.s32.totalorder %s27, 0
      %p179 = por %p177, %p178
      %p180 = scmp.le.s32.totalorder 1, %s21
      %p181 = scmp.lt.s32.totalorder %s21, 3
      %p182 = pnand %p180, %p181
      %p183 = pneg %p182
      // Predicated region
      $region9: #{wavepool2.1} parent=5 // pred_check
        _
      $region10: #{wavepool2.1} parent=5 // pred_check_branch
        %185 = sbr.rel (%p182) target = $region12
      $region11: #{wavepool2.1} parent=5 // pred_region
        %s186 = ssub.s32 %s21, 1
        // Predicated region
        $region13: #{wavepool2.1} parent=11 // pred_check
          %p187 = pneg %p42
        $region14: #{wavepool2.1} parent=11 // pred_check_branch
          %189 = sbr.rel (%p187) target = $region16
        $region15: #{wavepool2.1} parent=11 // pred_region
          _
        $region16: #{wavepool2.1} parent=11 // pred_fallthru
          _
      $region12: #{wavepool2.1} parent=5 // pred_fallthru
        _
      %p190 = scmp.lt.s32.totalorder %s21, 2
      // Predicated region
      $region17: #{wavepool2.1} parent=5 // pred_check
        %p191 = pneg %p190
      $region18: #{wavepool2.1} parent=5 // pred_check_branch
        %193 = sbr.rel (%p191) target = $region20
      $region19: #{wavepool2.1} parent=5 // pred_region
        // Predicated region
        $region21: #{wavepool2.1} parent=19 // pred_check
          %p194 = pneg %p62
        $region22: #{wavepool2.1} parent=19 // pred_check_branch
          %196 = sbr.rel (%p194) target = $region24
        $region23: #{wavepool2.1} parent=19 // pred_region
          %s197 = smul.u32 4, %s21
          %p198 = scmp.lt.s32.totalorder %s197, 7
          %s199 = scalar_select %p198, %s197, 7
          %s200 = smul.addr %s199, 8
          %s201 = scalar_lea.vmem %s1, %s200
          %s202 = smul.u32 4, %s21
        $region24: #{wavepool2.1} parent=19 // pred_fallthru
          _
      $region20: #{wavepool2.1} parent=5 // pred_fallthru
        _
      %p203 = scmp.le.s32.totalorder 1, %s21
      %p204 = scmp.lt.s32.totalorder %s21, 3
      %p205 = pnand %p203, %p204
      %p206 = pneg %p205
      // Predicated region
      $region25: #{wavepool2.1} parent=5 // pred_check
        _
      $region26: #{wavepool2.1} parent=5 // pred_check_branch
        %208 = sbr.rel (%p205) target = $region28
      $region27: #{wavepool2.1} parent=5 // pred_region
        %s209 = ssub.s32 %s21, 1
        %p210 = pneg %p42
        %p211 = pneg %p39
        %s212 = smul.u32 4, %s26
        %p213 = scmp.lt.s32.totalorder %s212, 7
        %s214 = scalar_select %p213, %s212, 7
        %s215 = smul.addr %s214, 8
        %s216 = scalar_lea.vmem %s1, %s215
        %p217 = pneg %p68
        %p218 = pneg %p65
        %p219 = pneg %p94
        %p220 = pneg %p91
        %s221 = sand.u32 %s81, 1
        %s222 = scalar_lea.sflag [#allocation3], %s221
        %s223 = sand.u32 %s81, 1
        %s224 = smul.addr %s223, 32
        %s225 = scalar_lea.vmem [#allocation2], %s224
        %p226 = pneg %p120
        %p227 = pneg %p117
        %s228 = sand.u32 %s26, 1
        %s229 = scalar_lea.sflag [#allocation5], %s228
        %s230 = sand.u32 %s107, 1
        %s231 = smul.addr %s230, 32
        %s232 = scalar_lea.vmem [#allocation4], %s231
        %p233 = pneg %p146
        %p234 = pneg %p143
        %s235 = sand.u32 %s26, 1
        %s236 = scalar_lea.sflag [#allocation5], %s235
        %s237 = sand.u32 %s133, 1
        %s238 = smul.addr %s237, 32
        %s239 = scalar_lea.vmem [#allocation6], %s238
        %p240 = pneg %p172
        %p241 = pneg %p169
        %s242 = sand.u32 %s159, 1
        %s243 = scalar_lea.sflag [#allocation8], %s242
        %s244 = sand.u32 %s159, 1
        %s245 = smul.addr %s244, 32
        %s246 = scalar_lea.vmem [#allocation7], %s245
        %s247 = smul.u32 4, %s26
        %p248 = scmp.lt.s32.totalorder %s247, 7
        %s249 = scalar_select %p248, %s247, 7
        %s250 = smul.addr %s249, 8
        %s251 = scalar_lea.vmem %s1, %s250
        %s252 = smul.u32 4, %s26
        %s253 = smul.u32 4, %s26
        %s254 = smul.u32 4, %s26
        %s255 = smul.u32 4, %s26
        %s256 = smul.u32 4, %s26
        %v257 = vld [vmem:[%s251] sm:$0xff]
        %v258 = vld [vmem:[%s251 + $0x8] sm:$0xff]
        %v259 = vld [vmem:[%s251 + $0x10] sm:$0xff]
        %v260 = vld [vmem:[%s251 + $0x18] sm:$0xff]
        %265 = vrot.lane.b32.xlu0 %v257, 112
        %v266 = vpop.permute.xlu0 %265
        %267 = vrot.lane.b32.xlu0 %v258, 112
        %v268 = vpop.permute.xlu0 %267
        %269 = vrot.lane.b32.xlu0 %v259, 112
        %v270 = vpop.permute.xlu0 %269
        %271 = vrot.lane.b32.xlu0 %v260, 112
        %v272 = vpop.permute.xlu0 %271
        %v277 = vadd.f32 %v257, %v266
        %v278 = vadd.f32 %v258, %v268
        %v279 = vadd.f32 %v259, %v270
        %v280 = vadd.f32 %v260, %v272
        %281 = vrot.lane.b32.xlu0 %v257, 16
        %v282 = vpop.permute.xlu0 %281
        %283 = vrot.lane.b32.xlu0 %v258, 16
        %v284 = vpop.permute.xlu0 %283
        %285 = vrot.lane.b32.xlu0 %v259, 16
        %v286 = vpop.permute.xlu0 %285
        %287 = vrot.lane.b32.xlu0 %v260, 16
        %v288 = vpop.permute.xlu0 %287
        %v293 = vsub.f32 %v257, %v282
        %v294 = vsub.f32 %v258, %v284
        %v295 = vsub.f32 %v259, %v286
        %v296 = vsub.f32 %v260, %v288
        %v297 = vld [vmem:[%s0] sm:$0xff]
        %v298 = vld [vmem:[%s0 + $0x8] sm:$0xff]
        %vm299 = vcmask 130048
        %v301 = vsel %vm299, %v277, 0
        %v304 = vsel %vm299, %v278, 0
        %v307 = vsel %vm299, %v279, 0
        %v310 = vsel %vm299, %v280, 0
        %312 = vmatprep.subr.mxu0 0.0
        %v313 = vand.u32 %v297, 4294901760
        %314 = vmatpush1.msra.mxu0 %v313
        %315 = vmatprep.subr.mxu0 0.0
        %v316 = vand.u32 %v298, 4294901760
        %317 = vmatpush1.msra.mxu0 %v316
        %318 = vmatprep.subr.mxu0 0.0
        %319 = vmatpush1.msra.mxu0 0.0
        %320 = vmatprep.subr.mxu0 0.0
        %321 = vmatpush1.msra.mxu0 0.0
        %322 = vmatprep.subr.mxu0 0.0
        %323 = vmatpush1.msra.mxu0 0.0
        %324 = vmatprep.subr.mxu0 0.0
        %325 = vmatpush1.msra.mxu0 0.0
        %326 = vmatprep.subr.mxu0 0.0
        %327 = vmatpush1.msra.mxu0 0.0
        %328 = vmatprep.subr.mxu0 0.0
        %329 = vmatpush1.msra.mxu0 0.0
        %330 = vmatprep.subr.mxu0 0.0
        %331 = vmatpush1.msra.mxu0 0.0
        %332 = vmatprep.subr.mxu0 0.0
        %333 = vmatpush1.msra.mxu0 0.0
        %334 = vmatprep.subr.mxu0 0.0
        %335 = vmatpush1.msra.mxu0 0.0
        %336 = vmatprep.subr.mxu0 0.0
        %337 = vmatpush1.msra.mxu0 0.0
        %338 = vmatprep.subr.mxu0 0.0
        %339 = vmatpush1.msra.mxu0 0.0
        %340 = vmatprep.subr.mxu0 0.0
        %341 = vmatpush1.msra.mxu0 0.0
        %342 = vmatprep.subr.mxu0 0.0
        %343 = vmatpush1.msra.mxu0 0.0
        %344 = vmatprep.subr.mxu0 0.0
        %345 = vmatpush1.msra.mxu0 0.0
        %346 = vmatprep.subr.mxu0 0.0
        %347 = vmatpush1.msra.mxu0 0.0
        %348 = vmatprep.subr.mxu0 0.0
        %349 = vmatpush1.msra.mxu0 0.0
        %350 = vmatprep.subr.mxu0 0.0
        %351 = vmatpush1.msra.mxu0 0.0
        %352 = vmatprep.subr.mxu0 0.0
        %353 = vmatpush1.msra.mxu0 0.0
        %354 = vmatprep.subr.mxu0 0.0
        %355 = vmatpush1.msra.mxu0 0.0
        %356 = vmatprep.subr.mxu0 0.0
        %357 = vmatpush1.msra.mxu0 0.0
        %358 = vmatprep.subr.mxu0 0.0
        %359 = vmatpush1.msra.mxu0 0.0
        %360 = vmatprep.subr.mxu0 0.0
        %361 = vmatpush1.msra.mxu0 0.0
        %362 = vmatprep.subr.mxu0 0.0
        %363 = vmatpush1.msra.mxu0 0.0
        %364 = vmatprep.subr.mxu0 0.0
        %365 = vmatpush1.msra.mxu0 0.0
        %366 = vmatprep.subr.mxu0 0.0
        %367 = vmatpush1.msra.mxu0 0.0
        %368 = vmatprep.subr.mxu0 0.0
        %369 = vmatpush1.msra.mxu0 0.0
        %370 = vmatprep.subr.mxu0 0.0
        %371 = vmatpush1.msra.mxu0 0.0
        %372 = vmatprep.subr.mxu0 0.0
        %373 = vmatpush1.msra.mxu0 0.0
        %374 = vmatprep.subr.mxu0 0.0
        %375 = vmatpush1.msra.mxu0 0.0
        %376 = vmatprep.subr.mxu0 0.0
        %377 = vmatpush1.msra.mxu0 0.0
        %378 = vmatprep.mubr.f32.mxu0 0.0
        %v379 = vand.u32 %v301, 4294901760
        %v380 = vsub.f32 %v301, %v379
        %v381 = vand.u32 %v380, 4294901760
        %v382 = vsub.f32 %v380, %v381
        %v383 = vand.u32 %v382, 4294901760
        %384 = vmatmul.mubr.f32.gmra.mrb[0].mxu0 %v383
        %v385 = vpop.f32.mrb[0].mxu0
        %v386 = vadd.f32 0.0, %v385
        %v387 = vpop.f32.mrb[0].mxu0
        %388 = vmatprep.mubr.f32.mxu0 0.0
        %v389 = vand.u32 %v304, 4294901760
        %v390 = vsub.f32 %v304, %v389
        %v391 = vand.u32 %v390, 4294901760
        %v392 = vsub.f32 %v390, %v391
        %v393 = vand.u32 %v392, 4294901760
        %394 = vmatmul.mubr.f32.gmra.mrb[0].mxu0 %v393
        %v395 = vpop.f32.mrb[0].mxu0
        %v396 = vadd.f32 0.0, %v395
        %v397 = vpop.f32.mrb[0].mxu0
        %398 = vmatprep.mubr.f32.mxu0 0.0
        %v399 = vand.u32 %v307, 4294901760
        %v400 = vsub.f32 %v307, %v399
        %v401 = vand.u32 %v400, 4294901760
        %v402 = vsub.f32 %v400, %v401
        %v403 = vand.u32 %v402, 4294901760
        %404 = vmatmul.mubr.f32.gmra.mrb[0].mxu0 %v403
        %v405 = vpop.f32.mrb[0].mxu0
        %v406 = vadd.f32 0.0, %v405
        %v407 = vpop.f32.mrb[0].mxu0
        %408 = vmatprep.mubr.f32.mxu0 0.0
        %v409 = vand.u32 %v310, 4294901760
        %v410 = vsub.f32 %v310, %v409
        %v411 = vand.u32 %v410, 4294901760
        %v412 = vsub.f32 %v410, %v411
        %v413 = vand.u32 %v412, 4294901760
        %414 = vmatmul.mubr.f32.gmra.mrb[0].mxu0 %v413
        %v415 = vpop.f32.mrb[0].mxu0
        %v416 = vadd.f32 0.0, %v415
        %v417 = vpop.f32.mrb[0].mxu0
        %418 = vdwg.mxu0
        %419 = vmatprep.subr.mxu0 0.0
        %v420 = vand.u32 %v297, 4294901760
        %v421 = vsub.f32 %v297, %v420
        %v422 = vand.u32 %v421, 4294901760
        %v423 = vsub.f32 %v421, %v422
        %v424 = vand.u32 %v423, 4294901760
        %425 = vmatpush1.msra.mxu0 %v424
        %426 = vmatprep.subr.mxu0 0.0
        %v427 = vand.u32 %v298, 4294901760
        %v428 = vsub.f32 %v298, %v427
        %v429 = vand.u32 %v428, 4294901760
        %v430 = vsub.f32 %v428, %v429
        %v431 = vand.u32 %v430, 4294901760
        %432 = vmatpush1.msra.mxu0 %v431
        %433 = vmatprep.subr.mxu0 0.0
        %434 = vmatpush1.msra.mxu0 0.0
        %435 = vmatprep.subr.mxu0 0.0
        %436 = vmatpush1.msra.mxu0 0.0
        %437 = vmatprep.subr.mxu0 0.0
        %438 = vmatpush1.msra.mxu0 0.0
        %439 = vmatprep.subr.mxu0 0.0
        %440 = vmatpush1.msra.mxu0 0.0
        %441 = vmatprep.subr.mxu0 0.0
        %442 = vmatpush1.msra.mxu0 0.0
        %443 = vmatprep.subr.mxu0 0.0
        %444 = vmatpush1.msra.mxu0 0.0
        %445 = vmatprep.subr.mxu0 0.0
        %446 = vmatpush1.msra.mxu0 0.0
        %447 = vmatprep.subr.mxu0 0.0
        %448 = vmatpush1.msra.mxu0 0.0
        %449 = vmatprep.subr.mxu0 0.0
        %450 = vmatpush1.msra.mxu0 0.0
        %451 = vmatprep.subr.mxu0 0.0
        %452 = vmatpush1.msra.mxu0 0.0
        %453 = vmatprep.subr.mxu0 0.0
        %454 = vmatpush1.msra.mxu0 0.0
        %455 = vmatprep.subr.mxu0 0.0
        %456 = vmatpush1.msra.mxu0 0.0
        %457 = vmatprep.subr.mxu0 0.0
        %458 = vmatpush1.msra.mxu0 0.0
        %459 = vmatprep.subr.mxu0 0.0
        %460 = vmatpush1.msra.mxu0 0.0
        %461 = vmatprep.subr.mxu0 0.0
        %462 = vmatpush1.msra.mxu0 0.0
        %463 = vmatprep.subr.mxu0 0.0
        %464 = vmatpush1.msra.mxu0 0.0
        %465 = vmatprep.subr.mxu0 0.0
        %466 = vmatpush1.msra.mxu0 0.0
        %467 = vmatprep.subr.mxu0 0.0
        %468 = vmatpush1.msra.mxu0 0.0
        %469 = vmatprep.subr.mxu0 0.0
        %470 = vmatpush1.msra.mxu0 0.0
        %471 = vmatprep.subr.mxu0 0.0
        %472 = vmatpush1.msra.mxu0 0.0
        %473 = vmatprep.subr.mxu0 0.0
        %474 = vmatpush1.msra.mxu0 0.0
        %475 = vmatprep.subr.mxu0 0.0
        %476 = vmatpush1.msra.mxu0 0.0
        %477 = vmatprep.subr.mxu0 0.0
        %478 = vmatpush1.msra.mxu0 0.0
        %479 = vmatprep.subr.mxu0 0.0
        %480 = vmatpush1.msra.mxu0 0.0
        %481 = vmatprep.subr.mxu0 0.0
        %482 = vmatpush1.msra.mxu0 0.0
        %483 = vmatprep.subr.mxu0 0.0
        %484 = vmatpush1.msra.mxu0 0.0
        %485 = vmatprep.subr.mxu0 0.0
        %486 = vmatpush1.msra.mxu0 0.0
        %487 = vmatprep.subr.mxu0 0.0
        %488 = vmatpush1.msra.mxu0 0.0
        %489 = vmatprep.subr.mxu0 0.0
        %490 = vmatpush1.msra.mxu0 0.0
        %491 = vmatprep.subr.mxu0 0.0
        %492 = vmatpush1.msra.mxu0 0.0
        %493 = vmatprep.mubr.f32.mxu0 0.0
        %v494 = vand.u32 %v301, 4294901760
        %495 = vmatmul.mubr.f32.gmra.mrb[0].mxu0 %v494
        %v496 = vpop.f32.mrb[0].mxu0
        %v497 = vadd.f32 %v386, %v496
        %v498 = vpop.f32.mrb[0].mxu0
        %499 = vmatprep.mubr.f32.mxu0 0.0
        %v500 = vand.u32 %v304, 4294901760
        %501 = vmatmul.mubr.f32.gmra.mrb[0].mxu0 %v500
        %v502 = vpop.f32.mrb[0].mxu0
        %v503 = vadd.f32 %v396, %v502
        %v504 = vpop.f32.mrb[0].mxu0
        %505 = vmatprep.mubr.f32.mxu0 0.0
        %v506 = vand.u32 %v307, 4294901760
        %507 = vmatmul.mubr.f32.gmra.mrb[0].mxu0 %v506
        %v508 = vpop.f32.mrb[0].mxu0
        %v509 = vadd.f32 %v406, %v508
        %v510 = vpop.f32.mrb[0].mxu0
        %511 = vmatprep.mubr.f32.mxu0 0.0
        %v512 = vand.u32 %v310, 4294901760
        %513 = vmatmul.mubr.f32.gmra.mrb[0].mxu0 %v512
        %v514 = vpop.f32.mrb[0].mxu0
        %v515 = vadd.f32 %v416, %v514
        %v516 = vpop.f32.mrb[0].mxu0
        %517 = vdwg.mxu0
        %518 = vmatprep.subr.mxu0 0.0
        %v519 = vand.u32 %v297, 4294901760
        %v520 = vsub.f32 %v297, %v519
        %521 = vmatpush1.msra.mxu0 %v520
        %522 = vmatprep.subr.mxu0 0.0
        %v523 = vand.u32 %v298, 4294901760
        %v524 = vsub.f32 %v298, %v523
        %525 = vmatpush1.msra.mxu0 %v524
        %526 = vmatprep.subr.mxu0 0.0
        %527 = vmatpush1.msra.mxu0 0.0
        %528 = vmatprep.subr.mxu0 0.0
        %529 = vmatpush1.msra.mxu0 0.0
        %530 = vmatprep.subr.mxu0 0.0
        %531 = vmatpush1.msra.mxu0 0.0
        %532 = vmatprep.subr.mxu0 0.0
        %533 = vmatpush1.msra.mxu0 0.0
        %534 = vmatprep.subr.mxu0 0.0
        %535 = vmatpush1.msra.mxu0 0.0
        %536 = vmatprep.subr.mxu0 0.0
        %537 = vmatpush1.msra.mxu0 0.0
        %538 = vmatprep.subr.mxu0 0.0
        %539 = vmatpush1.msra.mxu0 0.0
        %540 = vmatprep.subr.mxu0 0.0
        %541 = vmatpush1.msra.mxu0 0.0
        %542 = vmatprep.subr.mxu0 0.0
        %543 = vmatpush1.msra.mxu0 0.0
        %544 = vmatprep.subr.mxu0 0.0
        %545 = vmatpush1.msra.mxu0 0.0
        %546 = vmatprep.subr.mxu0 0.0
        %547 = vmatpush1.msra.mxu0 0.0
        %548 = vmatprep.subr.mxu0 0.0
        %549 = vmatpush1.msra.mxu0 0.0
        %550 = vmatprep.subr.mxu0 0.0
        %551 = vmatpush1.msra.mxu0 0.0
        %552 = vmatprep.subr.mxu0 0.0
        %553 = vmatpush1.msra.mxu0 0.0
        %554 = vmatprep.subr.mxu0 0.0
        %555 = vmatpush1.msra.mxu0 0.0
        %556 = vmatprep.subr.mxu0 0.0
        %557 = vmatpush1.msra.mxu0 0.0
        %558 = vmatprep.subr.mxu0 0.0
        %559 = vmatpush1.msra.mxu0 0.0
        %560 = vmatprep.subr.mxu0 0.0
        %561 = vmatpush1.msra.mxu0 0.0
        %562 = vmatprep.subr.mxu0 0.0
        %563 = vmatpush1.msra.mxu0 0.0
        %564 = vmatprep.subr.mxu0 0.0
        %565 = vmatpush1.msra.mxu0 0.0
        %566 = vmatprep.subr.mxu0 0.0
        %567 = vmatpush1.msra.mxu0 0.0
        %568 = vmatprep.subr.mxu0 0.0
        %569 = vmatpush1.msra.mxu0 0.0
        %570 = vmatprep.subr.mxu0 0.0
        %571 = vmatpush1.msra.mxu0 0.0
        %572 = vmatprep.subr.mxu0 0.0
        %573 = vmatpush1.msra.mxu0 0.0
        %574 = vmatprep.subr.mxu0 0.0
        %575 = vmatpush1.msra.mxu0 0.0
        %576 = vmatprep.subr.mxu0 0.0
        %577 = vmatpush1.msra.mxu0 0.0
        %578 = vmatprep.subr.mxu0 0.0
        %579 = vmatpush1.msra.mxu0 0.0
        %580 = vmatprep.subr.mxu0 0.0
        %581 = vmatpush1.msra.mxu0 0.0
        %582 = vmatprep.subr.mxu0 0.0
        %583 = vmatpush1.msra.mxu0 0.0
        %584 = vmatprep.subr.mxu0 0.0
        %585 = vmatpush1.msra.mxu0 0.0
        %586 = vmatprep.mubr.f32.mxu0 0.0
        %v587 = vand.u32 %v301, 4294901760
        %v588 = vsub.f32 %v301, %v587
        %589 = vmatmul.mubr.f32.gmra.mrb[0].mxu0 %v588
        %v590 = vpop.f32.mrb[0].mxu0
        %v591 = vadd.f32 %v497, %v590
        %v592 = vpop.f32.mrb[0].mxu0
        %593 = vmatprep.mubr.f32.mxu0 0.0
        %v594 = vand.u32 %v304, 4294901760
        %v595 = vsub.f32 %v304, %v594
        %596 = vmatmul.mubr.f32.gmra.mrb[0].mxu0 %v595
        %v597 = vpop.f32.mrb[0].mxu0
        %v598 = vadd.f32 %v503, %v597
        %v599 = vpop.f32.mrb[0].mxu0
        %600 = vmatprep.mubr.f32.mxu0 0.0
        %v601 = vand.u32 %v307, 4294901760
        %v602 = vsub.f32 %v307, %v601
        %603 = vmatmul.mubr.f32.gmra.mrb[0].mxu0 %v602
        %v604 = vpop.f32.mrb[0].mxu0
        %v605 = vadd.f32 %v509, %v604
        %v606 = vpop.f32.mrb[0].mxu0
        %607 = vmatprep.mubr.f32.mxu0 0.0
        %v608 = vand.u32 %v310, 4294901760
        %v609 = vsub.f32 %v310, %v608
        %610 = vmatmul.mubr.f32.gmra.mrb[0].mxu0 %v609
        %v611 = vpop.f32.mrb[0].mxu0
        %v612 = vadd.f32 %v515, %v611
        %v613 = vpop.f32.mrb[0].mxu0
        %614 = vdwg.mxu0
        %615 = vmatprep.subr.mxu0 0.0
        %v616 = vand.u32 %v297, 4294901760
        %617 = vmatpush1.msra.mxu0 %v616
        %618 = vmatprep.subr.mxu0 0.0
        %v619 = vand.u32 %v298, 4294901760
        %620 = vmatpush1.msra.mxu0 %v619
        %621 = vmatprep.subr.mxu0 0.0
        %622 = vmatpush1.msra.mxu0 0.0
        %623 = vmatprep.subr.mxu0 0.0
        %624 = vmatpush1.msra.mxu0 0.0
        %625 = vmatprep.subr.mxu0 0.0
        %626 = vmatpush1.msra.mxu0 0.0
        %627 = vmatprep.subr.mxu0 0.0
        %628 = vmatpush1.msra.mxu0 0.0
        %629 = vmatprep.subr.mxu0 0.0
        %630 = vmatpush1.msra.mxu0 0.0
        %631 = vmatprep.subr.mxu0 0.0
        %632 = vmatpush1.msra.mxu0 0.0
        %633 = vmatprep.subr.mxu0 0.0
        %634 = vmatpush1.msra.mxu0 0.0
        %635 = vmatprep.subr.mxu0 0.0
        %636 = vmatpush1.msra.mxu0 0.0
        %637 = vmatprep.subr.mxu0 0.0
        %638 = vmatpush1.msra.mxu0 0.0
        %639 = vmatprep.subr.mxu0 0.0
        %640 = vmatpush1.msra.mxu0 0.0
        %641 = vmatprep.subr.mxu0 0.0
        %642 = vmatpush1.msra.mxu0 0.0
        %643 = vmatprep.subr.mxu0 0.0
        %644 = vmatpush1.msra.mxu0 0.0
        %645 = vmatprep.subr.mxu0 0.0
        %646 = vmatpush1.msra.mxu0 0.0
        %647 = vmatprep.subr.mxu0 0.0
        %648 = vmatpush1.msra.mxu0 0.0
        %649 = vmatprep.subr.mxu0 0.0
        %650 = vmatpush1.msra.mxu0 0.0
        %651 = vmatprep.subr.mxu0 0.0
        %652 = vmatpush1.msra.mxu0 0.0
        %653 = vmatprep.subr.mxu0 0.0
        %654 = vmatpush1.msra.mxu0 0.0
        %655 = vmatprep.subr.mxu0 0.0
        %656 = vmatpush1.msra.mxu0 0.0
        %657 = vmatprep.subr.mxu0 0.0
        %658 = vmatpush1.msra.mxu0 0.0
        %659 = vmatprep.subr.mxu0 0.0
        %660 = vmatpush1.msra.mxu0 0.0
        %661 = vmatprep.subr.mxu0 0.0
        %662 = vmatpush1.msra.mxu0 0.0
        %663 = vmatprep.subr.mxu0 0.0
        %664 = vmatpush1.msra.mxu0 0.0
        %665 = vmatprep.subr.mxu0 0.0
        %666 = vmatpush1.msra.mxu0 0.0
        %667 = vmatprep.subr.mxu0 0.0
        %668 = vmatpush1.msra.mxu0 0.0
        %669 = vmatprep.subr.mxu0 0.0
        %670 = vmatpush1.msra.mxu0 0.0
        %671 = vmatprep.subr.mxu0 0.0
        %672 = vmatpush1.msra.mxu0 0.0
        %673 = vmatprep.subr.mxu0 0.0
        %674 = vmatpush1.msra.mxu0 0.0
        %675 = vmatprep.subr.mxu0 0.0
        %676 = vmatpush1.msra.mxu0 0.0
        %677 = vmatprep.subr.mxu0 0.0
        %678 = vmatpush1.msra.mxu0 0.0
        %679 = vmatprep.subr.mxu0 0.0
        %680 = vmatpush1.msra.mxu0 0.0
        %681 = vmatprep.mubr.f32.mxu0 0.0
        %v682 = vand.u32 %v301, 4294901760
        %v683 = vsub.f32 %v301, %v682
        %v684 = vand.u32 %v683, 4294901760
        %685 = vmatmul.mubr.f32.gmra.mrb[0].mxu0 %v684
        %v686 = vpop.f32.mrb[0].mxu0
        %v687 = vadd.f32 %v591, %v686
        %v688 = vpop.f32.mrb[0].mxu0
        %689 = vmatprep.mubr.f32.mxu0 0.0
        %v690 = vand.u32 %v304, 4294901760
        %v691 = vsub.f32 %v304, %v690
        %v692 = vand.u32 %v691, 4294901760
        %693 = vmatmul.mubr.f32.gmra.mrb[0].mxu0 %v692
        %v694 = vpop.f32.mrb[0].mxu0
        %v695 = vadd.f32 %v598, %v694
        %v696 = vpop.f32.mrb[0].mxu0
        %697 = vmatprep.mubr.f32.mxu0 0.0
        %v698 = vand.u32 %v307, 4294901760
        %v699 = vsub.f32 %v307, %v698
        %v700 = vand.u32 %v699, 4294901760
        %701 = vmatmul.mubr.f32.gmra.mrb[0].mxu0 %v700
        %v702 = vpop.f32.mrb[0].mxu0
        %v703 = vadd.f32 %v605, %v702
        %v704 = vpop.f32.mrb[0].mxu0
        %705 = vmatprep.mubr.f32.mxu0 0.0
        %v706 = vand.u32 %v310, 4294901760
        %v707 = vsub.f32 %v310, %v706
        %v708 = vand.u32 %v707, 4294901760
        %709 = vmatmul.mubr.f32.gmra.mrb[0].mxu0 %v708
        %v710 = vpop.f32.mrb[0].mxu0
        %v711 = vadd.f32 %v612, %v710
        %v712 = vpop.f32.mrb[0].mxu0
        %713 = vdwg.mxu0
        %714 = vmatprep.subr.mxu0 0.0
        %v715 = vand.u32 %v297, 4294901760
        %v716 = vsub.f32 %v297, %v715
        %v717 = vand.u32 %v716, 4294901760
        %718 = vmatpush1.msra.mxu0 %v717
        %719 = vmatprep.subr.mxu0 0.0
        %v720 = vand.u32 %v298, 4294901760
        %v721 = vsub.f32 %v298, %v720
        %v722 = vand.u32 %v721, 4294901760
        %723 = vmatpush1.msra.mxu0 %v722
        %724 = vmatprep.subr.mxu0 0.0
        %725 = vmatpush1.msra.mxu0 0.0
        %726 = vmatprep.subr.mxu0 0.0
        %727 = vmatpush1.msra.mxu0 0.0
        %728 = vmatprep.subr.mxu0 0.0
        %729 = vmatpush1.msra.mxu0 0.0
        %730 = vmatprep.subr.mxu0 0.0
        %731 = vmatpush1.msra.mxu0 0.0
        %732 = vmatprep.subr.mxu0 0.0
        %733 = vmatpush1.msra.mxu0 0.0
        %734 = vmatprep.subr.mxu0 0.0
        %735 = vmatpush1.msra.mxu0 0.0
        %736 = vmatprep.subr.mxu0 0.0
        %737 = vmatpush1.msra.mxu0 0.0
        %738 = vmatprep.subr.mxu0 0.0
        %739 = vmatpush1.msra.mxu0 0.0
        %740 = vmatprep.subr.mxu0 0.0
        %741 = vmatpush1.msra.mxu0 0.0
        %742 = vmatprep.subr.mxu0 0.0
        %743 = vmatpush1.msra.mxu0 0.0
        %744 = vmatprep.subr.mxu0 0.0
        %745 = vmatpush1.msra.mxu0 0.0
        %746 = vmatprep.subr.mxu0 0.0
        %747 = vmatpush1.msra.mxu0 0.0
        %748 = vmatprep.subr.mxu0 0.0
        %749 = vmatpush1.msra.mxu0 0.0
        %750 = vmatprep.subr.mxu0 0.0
        %751 = vmatpush1.msra.mxu0 0.0
        %752 = vmatprep.subr.mxu0 0.0
        %753 = vmatpush1.msra.mxu0 0.0
        %754 = vmatprep.subr.mxu0 0.0
        %755 = vmatpush1.msra.mxu0 0.0
        %756 = vmatprep.subr.mxu0 0.0
        %757 = vmatpush1.msra.mxu0 0.0
        %758 = vmatprep.subr.mxu0 0.0
        %759 = vmatpush1.msra.mxu0 0.0
        %760 = vmatprep.subr.mxu0 0.0
        %761 = vmatpush1.msra.mxu0 0.0
        %762 = vmatprep.subr.mxu0 0.0
        %763 = vmatpush1.msra.mxu0 0.0
        %764 = vmatprep.subr.mxu0 0.0
        %765 = vmatpush1.msra.mxu0 0.0
        %766 = vmatprep.subr.mxu0 0.0
        %767 = vmatpush1.msra.mxu0 0.0
        %768 = vmatprep.subr.mxu0 0.0
        %769 = vmatpush1.msra.mxu0 0.0
        %770 = vmatprep.subr.mxu0 0.0
        %771 = vmatpush1.msra.mxu0 0.0
        %772 = vmatprep.subr.mxu0 0.0
        %773 = vmatpush1.msra.mxu0 0.0
        %774 = vmatprep.subr.mxu0 0.0
        %775 = vmatpush1.msra.mxu0 0.0
        %776 = vmatprep.subr.mxu0 0.0
        %777 = vmatpush1.msra.mxu0 0.0
        %778 = vmatprep.subr.mxu0 0.0
        %779 = vmatpush1.msra.mxu0 0.0
        %780 = vmatprep.subr.mxu0 0.0
        %781 = vmatpush1.msra.mxu0 0.0
        %782 = vmatprep.subr.mxu0 0.0
        %783 = vmatpush1.msra.mxu0 0.0
        %784 = vmatprep.mubr.f32.mxu0 0.0
        %v785 = vand.u32 %v301, 4294901760
        %786 = vmatmul.mubr.f32.gmra.mrb[0].mxu0 %v785
        %v787 = vpop.f32.mrb[0].mxu0
        %v788 = vadd.f32 %v687, %v787
        %v789 = vpop.f32.mrb[0].mxu0
        %790 = vmatprep.mubr.f32.mxu0 0.0
        %v791 = vand.u32 %v304, 4294901760
        %792 = vmatmul.mubr.f32.gmra.mrb[0].mxu0 %v791
        %v793 = vpop.f32.mrb[0].mxu0
        %v794 = vadd.f32 %v695, %v793
        %v795 = vpop.f32.mrb[0].mxu0
        %796 = vmatprep.mubr.f32.mxu0 0.0
        %v797 = vand.u32 %v307, 4294901760
        %798 = vmatmul.mubr.f32.gmra.mrb[0].mxu0 %v797
        %v799 = vpop.f32.mrb[0].mxu0
        %v800 = vadd.f32 %v703, %v799
        %v801 = vpop.f32.mrb[0].mxu0
        %802 = vmatprep.mubr.f32.mxu0 0.0
        %v803 = vand.u32 %v310, 4294901760
        %804 = vmatmul.mubr.f32.gmra.mrb[0].mxu0 %v803
        %v805 = vpop.f32.mrb[0].mxu0
        %v806 = vadd.f32 %v711, %v805
        %v807 = vpop.f32.mrb[0].mxu0
        %808 = vdwg.mxu0
        %809 = vmatprep.subr.mxu0 0.0
        %v810 = vand.u32 %v297, 4294901760
        %811 = vmatpush1.msra.mxu0 %v810
        %812 = vmatprep.subr.mxu0 0.0
        %v813 = vand.u32 %v298, 4294901760
        %814 = vmatpush1.msra.mxu0 %v813
        %815 = vmatprep.subr.mxu0 0.0
        %816 = vmatpush1.msra.mxu0 0.0
        %817 = vmatprep.subr.mxu0 0.0
        %818 = vmatpush1.msra.mxu0 0.0
        %819 = vmatprep.subr.mxu0 0.0
        %820 = vmatpush1.msra.mxu0 0.0
        %821 = vmatprep.subr.mxu0 0.0
        %822 = vmatpush1.msra.mxu0 0.0
        %823 = vmatprep.subr.mxu0 0.0
        %824 = vmatpush1.msra.mxu0 0.0
        %825 = vmatprep.subr.mxu0 0.0
        %826 = vmatpush1.msra.mxu0 0.0
        %827 = vmatprep.subr.mxu0 0.0
        %828 = vmatpush1.msra.mxu0 0.0
        %829 = vmatprep.subr.mxu0 0.0
        %830 = vmatpush1.msra.mxu0 0.0
        %831 = vmatprep.subr.mxu0 0.0
        %832 = vmatpush1.msra.mxu0 0.0
        %833 = vmatprep.subr.mxu0 0.0
        %834 = vmatpush1.msra.mxu0 0.0
        %835 = vmatprep.subr.mxu0 0.0
        %836 = vmatpush1.msra.mxu0 0.0
        %837 = vmatprep.subr.mxu0 0.0
        %838 = vmatpush1.msra.mxu0 0.0
        %839 = vmatprep.subr.mxu0 0.0
        %840 = vmatpush1.msra.mxu0 0.0
        %841 = vmatprep.subr.mxu0 0.0
        %842 = vmatpush1.msra.mxu0 0.0
        %843 = vmatprep.subr.mxu0 0.0
        %844 = vmatpush1.msra.mxu0 0.0
        %845 = vmatprep.subr.mxu0 0.0
        %846 = vmatpush1.msra.mxu0 0.0
        %847 = vmatprep.subr.mxu0 0.0
        %848 = vmatpush1.msra.mxu0 0.0
        %849 = vmatprep.subr.mxu0 0.0
        %850 = vmatpush1.msra.mxu0 0.0
        %851 = vmatprep.subr.mxu0 0.0
        %852 = vmatpush1.msra.mxu0 0.0
        %853 = vmatprep.subr.mxu0 0.0
        %854 = vmatpush1.msra.mxu0 0.0
        %855 = vmatprep.subr.mxu0 0.0
        %856 = vmatpush1.msra.mxu0 0.0
        %857 = vmatprep.subr.mxu0 0.0
        %858 = vmatpush1.msra.mxu0 0.0
        %859 = vmatprep.subr.mxu0 0.0
        %860 = vmatpush1.msra.mxu0 0.0
        %861 = vmatprep.subr.mxu0 0.0
        %862 = vmatpush1.msra.mxu0 0.0
        %863 = vmatprep.subr.mxu0 0.0
        %864 = vmatpush1.msra.mxu0 0.0
        %865 = vmatprep.subr.mxu0 0.0
        %866 = vmatpush1.msra.mxu0 0.0
        %867 = vmatprep.subr.mxu0 0.0
        %868 = vmatpush1.msra.mxu0 0.0
        %869 = vmatprep.subr.mxu0 0.0
        %870 = vmatpush1.msra.mxu0 0.0
        %871 = vmatprep.subr.mxu0 0.0
        %872 = vmatpush1.msra.mxu0 0.0
        %873 = vmatprep.subr.mxu0 0.0
        %874 = vmatpush1.msra.mxu0 0.0
        %875 = vmatprep.mubr.f32.mxu0 0.0
        %v876 = vand.u32 %v301, 4294901760
        %877 = vmatmul.mubr.f32.gmra.mrb[0].mxu0 %v876
        %v878 = vpop.f32.mrb[0].mxu0
        %v879 = vadd.f32 %v788, %v878
        %v880 = vpop.f32.mrb[0].mxu0
        %881 = vmatprep.mubr.f32.mxu0 0.0
        %v882 = vand.u32 %v304, 4294901760
        %883 = vmatmul.mubr.f32.gmra.mrb[0].mxu0 %v882
        %v884 = vpop.f32.mrb[0].mxu0
        %v885 = vadd.f32 %v794, %v884
        %v886 = vpop.f32.mrb[0].mxu0
        %887 = vmatprep.mubr.f32.mxu0 0.0
        %v888 = vand.u32 %v307, 4294901760
        %889 = vmatmul.mubr.f32.gmra.mrb[0].mxu0 %v888
        %v890 = vpop.f32.mrb[0].mxu0
        %v891 = vadd.f32 %v800, %v890
        %v892 = vpop.f32.mrb[0].mxu0
        %893 = vmatprep.mubr.f32.mxu0 0.0
        %v894 = vand.u32 %v310, 4294901760
        %895 = vmatmul.mubr.f32.gmra.mrb[0].mxu0 %v894
        %v896 = vpop.f32.mrb[0].mxu0
        %v897 = vadd.f32 %v806, %v896
        %v898 = vpop.f32.mrb[0].mxu0
        %899 = vdwg.mxu0
        %904 = vrot.lane.b32.xlu0 %v293, 112
        %v905 = vpop.permute.xlu0 %904
        %906 = vrot.lane.b32.xlu0 %v294, 112
        %v907 = vpop.permute.xlu0 %906
        %908 = vrot.lane.b32.xlu0 %v295, 112
        %v909 = vpop.permute.xlu0 %908
        %910 = vrot.lane.b32.xlu0 %v296, 112
        %v911 = vpop.permute.xlu0 %910
        %v912 = vsel %vm299, %v905, 0
        %v914 = vsel %vm299, %v907, 0
        %v916 = vsel %vm299, %v909, 0
        %v918 = vsel %vm299, %v911, 0
        %920 = vmatprep.subr.mxu0 0.0
        %v921 = vand.u32 %v297, 4294901760
        %922 = vmatpush1.msra.mxu0 %v921
        %923 = vmatprep.subr.mxu0 0.0
        %v924 = vand.u32 %v298, 4294901760
        %925 = vmatpush1.msra.mxu0 %v924
        %926 = vmatprep.subr.mxu0 0.0
        %927 = vmatpush1.msra.mxu0 0.0
        %928 = vmatprep.subr.mxu0 0.0
        %929 = vmatpush1.msra.mxu0 0.0
        %930 = vmatprep.subr.mxu0 0.0
        %931 = vmatpush1.msra.mxu0 0.0
        %932 = vmatprep.subr.mxu0 0.0
        %933 = vmatpush1.msra.mxu0 0.0
        %934 = vmatprep.subr.mxu0 0.0
        %935 = vmatpush1.msra.mxu0 0.0
        %936 = vmatprep.subr.mxu0 0.0
        %937 = vmatpush1.msra.mxu0 0.0
        %938 = vmatprep.subr.mxu0 0.0
        %939 = vmatpush1.msra.mxu0 0.0
        %940 = vmatprep.subr.mxu0 0.0
        %941 = vmatpush1.msra.mxu0 0.0
        %942 = vmatprep.subr.mxu0 0.0
        %943 = vmatpush1.msra.mxu0 0.0
        %944 = vmatprep.subr.mxu0 0.0
        %945 = vmatpush1.msra.mxu0 0.0
        %946 = vmatprep.subr.mxu0 0.0
        %947 = vmatpush1.msra.mxu0 0.0
        %948 = vmatprep.subr.mxu0 0.0
        %949 = vmatpush1.msra.mxu0 0.0
        %950 = vmatprep.subr.mxu0 0.0
        %951 = vmatpush1.msra.mxu0 0.0
        %952 = vmatprep.subr.mxu0 0.0
        %953 = vmatpush1.msra.mxu0 0.0
        %954 = vmatprep.subr.mxu0 0.0
        %955 = vmatpush1.msra.mxu0 0.0
        %956 = vmatprep.subr.mxu0 0.0
        %957 = vmatpush1.msra.mxu0 0.0
        %958 = vmatprep.subr.mxu0 0.0
        %959 = vmatpush1.msra.mxu0 0.0
        %960 = vmatprep.subr.mxu0 0.0
        %961 = vmatpush1.msra.mxu0 0.0
        %962 = vmatprep.subr.mxu0 0.0
        %963 = vmatpush1.msra.mxu0 0.0
        %964 = vmatprep.subr.mxu0 0.0
        %965 = vmatpush1.msra.mxu0 0.0
        %966 = vmatprep.subr.mxu0 0.0
        %967 = vmatpush1.msra.mxu0 0.0
        %968 = vmatprep.subr.mxu0 0.0
        %969 = vmatpush1.msra.mxu0 0.0
        %970 = vmatprep.subr.mxu0 0.0
        %971 = vmatpush1.msra.mxu0 0.0
        %972 = vmatprep.subr.mxu0 0.0
        %973 = vmatpush1.msra.mxu0 0.0
        %974 = vmatprep.subr.mxu0 0.0
        %975 = vmatpush1.msra.mxu0 0.0
        %976 = vmatprep.subr.mxu0 0.0
        %977 = vmatpush1.msra.mxu0 0.0
        %978 = vmatprep.subr.mxu0 0.0
        %979 = vmatpush1.msra.mxu0 0.0
        %980 = vmatprep.subr.mxu0 0.0
        %981 = vmatpush1.msra.mxu0 0.0
        %982 = vmatprep.subr.mxu0 0.0
        %983 = vmatpush1.msra.mxu0 0.0
        %984 = vmatprep.subr.mxu0 0.0
        %985 = vmatpush1.msra.mxu0 0.0
        %986 = vmatprep.mubr.f32.mxu0 0.0
        %v987 = vand.u32 %v912, 4294901760
        %v988 = vsub.f32 %v912, %v987
        %v989 = vand.u32 %v988, 4294901760
        %v990 = vsub.f32 %v988, %v989
        %v991 = vand.u32 %v990, 4294901760
        %992 = vmatmul.mubr.f32.gmra.mrb[0].mxu0 %v991
        %v993 = vpop.f32.mrb[0].mxu0
        %v994 = vadd.f32 0.0, %v993
        %v995 = vpop.f32.mrb[0].mxu0
        %996 = vmatprep.mubr.f32.mxu0 0.0
        %v997 = vand.u32 %v914, 4294901760
        %v998 = vsub.f32 %v914, %v997
        %v999 = vand.u32 %v998, 4294901760
        %v1000 = vsub.f32 %v998, %v999
        %v1001 = vand.u32 %v1000, 4294901760
        %1002 = vmatmul.mubr.f32.gmra.mrb[0].mxu0 %v1001
        %v1003 = vpop.f32.mrb[0].mxu0
        %v1004 = vadd.f32 0.0, %v1003
        %v1005 = vpop.f32.mrb[0].mxu0
        %1006 = vmatprep.mubr.f32.mxu0 0.0
        %v1007 = vand.u32 %v916, 4294901760
        %v1008 = vsub.f32 %v916, %v1007
        %v1009 = vand.u32 %v1008, 4294901760
        %v1010 = vsub.f32 %v1008, %v1009
        %v1011 = vand.u32 %v1010, 4294901760
        %1012 = vmatmul.mubr.f32.gmra.mrb[0].mxu0 %v1011
        %v1013 = vpop.f32.mrb[0].mxu0
        %v1014 = vadd.f32 0.0, %v1013
        %v1015 = vpop.f32.mrb[0].mxu0
        %1016 = vmatprep.mubr.f32.mxu0 0.0
        %v1017 = vand.u32 %v918, 4294901760
        %v1018 = vsub.f32 %v918, %v1017
        %v1019 = vand.u32 %v1018, 4294901760
        %v1020 = vsub.f32 %v1018, %v1019
        %v1021 = vand.u32 %v1020, 4294901760
        %1022 = vmatmul.mubr.f32.gmra.mrb[0].mxu0 %v1021
        %v1023 = vpop.f32.mrb[0].mxu0
        %v1024 = vadd.f32 0.0, %v1023
        %v1025 = vpop.f32.mrb[0].mxu0
        %1026 = vdwg.mxu0
        %1027 = vmatprep.subr.mxu0 0.0
        %v1028 = vand.u32 %v297, 4294901760
        %v1029 = vsub.f32 %v297, %v1028
        %v1030 = vand.u32 %v1029, 4294901760
        %v1031 = vsub.f32 %v1029, %v1030
        %v1032 = vand.u32 %v1031, 4294901760
        %1033 = vmatpush1.msra.mxu0 %v1032
        %1034 = vmatprep.subr.mxu0 0.0
        %v1035 = vand.u32 %v298, 4294901760
        %v1036 = vsub.f32 %v298, %v1035
        %v1037 = vand.u32 %v1036, 4294901760
        %v1038 = vsub.f32 %v1036, %v1037
        %v1039 = vand.u32 %v1038, 4294901760
        %1040 = vmatpush1.msra.mxu0 %v1039
        %1041 = vmatprep.subr.mxu0 0.0
        %1042 = vmatpush1.msra.mxu0 0.0
        %1043 = vmatprep.subr.mxu0 0.0
        %1044 = vmatpush1.msra.mxu0 0.0
        %1045 = vmatprep.subr.mxu0 0.0
        %1046 = vmatpush1.msra.mxu0 0.0
        %1047 = vmatprep.subr.mxu0 0.0
        %1048 = vmatpush1.msra.mxu0 0.0
        %1049 = vmatprep.subr.mxu0 0.0
        %1050 = vmatpush1.msra.mxu0 0.0
        %1051 = vmatprep.subr.mxu0 0.0
        %1052 = vmatpush1.msra.mxu0 0.0
        %1053 = vmatprep.subr.mxu0 0.0
        %1054 = vmatpush1.msra.mxu0 0.0
        %1055 = vmatprep.subr.mxu0 0.0
        %1056 = vmatpush1.msra.mxu0 0.0
        %1057 = vmatprep.subr.mxu0 0.0
        %1058 = vmatpush1.msra.mxu0 0.0
        %1059 = vmatprep.subr.mxu0 0.0
        %1060 = vmatpush1.msra.mxu0 0.0
        %1061 = vmatprep.subr.mxu0 0.0
        %1062 = vmatpush1.msra.mxu0 0.0
        %1063 = vmatprep.subr.mxu0 0.0
        %1064 = vmatpush1.msra.mxu0 0.0
        %1065 = vmatprep.subr.mxu0 0.0
        %1066 = vmatpush1.msra.mxu0 0.0
        %1067 = vmatprep.subr.mxu0 0.0
        %1068 = vmatpush1.msra.mxu0 0.0
        %1069 = vmatprep.subr.mxu0 0.0
        %1070 = vmatpush1.msra.mxu0 0.0
        %1071 = vmatprep.subr.mxu0 0.0
        %1072 = vmatpush1.msra.mxu0 0.0
        %1073 = vmatprep.subr.mxu0 0.0
        %1074 = vmatpush1.msra.mxu0 0.0
        %1075 = vmatprep.subr.mxu0 0.0
        %1076 = vmatpush1.msra.mxu0 0.0
        %1077 = vmatprep.subr.mxu0 0.0
        %1078 = vmatpush1.msra.mxu0 0.0
        %1079 = vmatprep.subr.mxu0 0.0
        %1080 = vmatpush1.msra.mxu0 0.0
        %1081 = vmatprep.subr.mxu0 0.0
        %1082 = vmatpush1.msra.mxu0 0.0
        %1083 = vmatprep.subr.mxu0 0.0
        %1084 = vmatpush1.msra.mxu0 0.0
        %1085 = vmatprep.subr.mxu0 0.0
        %1086 = vmatpush1.msra.mxu0 0.0
        %1087 = vmatprep.subr.mxu0 0.0
        %1088 = vmatpush1.msra.mxu0 0.0
        %1089 = vmatprep.subr.mxu0 0.0
        %1090 = vmatpush1.msra.mxu0 0.0
        %1091 = vmatprep.subr.mxu0 0.0
        %1092 = vmatpush1.msra.mxu0 0.0
        %1093 = vmatprep.subr.mxu0 0.0
        %1094 = vmatpush1.msra.mxu0 0.0
        %1095 = vmatprep.subr.mxu0 0.0
        %1096 = vmatpush1.msra.mxu0 0.0
        %1097 = vmatprep.subr.mxu0 0.0
        %1098 = vmatpush1.msra.mxu0 0.0
        %1099 = vmatprep.subr.mxu0 0.0
        %1100 = vmatpush1.msra.mxu0 0.0
        %1101 = vmatprep.mubr.f32.mxu0 0.0
        %v1102 = vand.u32 %v912, 4294901760
        %1103 = vmatmul.mubr.f32.gmra.mrb[0].mxu0 %v1102
        %v1104 = vpop.f32.mrb[0].mxu0
        %v1105 = vadd.f32 %v994, %v1104
        %v1106 = vpop.f32.mrb[0].mxu0
        %1107 = vmatprep.mubr.f32.mxu0 0.0
        %v1108 = vand.u32 %v914, 4294901760
        %1109 = vmatmul.mubr.f32.gmra.mrb[0].mxu0 %v1108
        %v1110 = vpop.f32.mrb[0].mxu0
        %v1111 = vadd.f32 %v1004, %v1110
        %v1112 = vpop.f32.mrb[0].mxu0
        %1113 = vmatprep.mubr.f32.mxu0 0.0
        %v1114 = vand.u32 %v916, 4294901760
        %1115 = vmatmul.mubr.f32.gmra.mrb[0].mxu0 %v1114
        %v1116 = vpop.f32.mrb[0].mxu0
        %v1117 = vadd.f32 %v1014, %v1116
        %v1118 = vpop.f32.mrb[0].mxu0
        %1119 = vmatprep.mubr.f32.mxu0 0.0
        %v1120 = vand.u32 %v918, 4294901760
        %1121 = vmatmul.mubr.f32.gmra.mrb[0].mxu0 %v1120
        %v1122 = vpop.f32.mrb[0].mxu0
        %v1123 = vadd.f32 %v1024, %v1122
        %v1124 = vpop.f32.mrb[0].mxu0
        %1125 = vdwg.mxu0
        %1126 = vmatprep.subr.mxu0 0.0
        %v1127 = vand.u32 %v297, 4294901760
        %v1128 = vsub.f32 %v297, %v1127
        %1129 = vmatpush1.msra.mxu0 %v1128
        %1130 = vmatprep.subr.mxu0 0.0
        %v1131 = vand.u32 %v298, 4294901760
        %v1132 = vsub.f32 %v298, %v1131
        %1133 = vmatpush1.msra.mxu0 %v1132
        %1134 = vmatprep.subr.mxu0 0.0
        %1135 = vmatpush1.msra.mxu0 0.0
        %1136 = vmatprep.subr.mxu0 0.0
        %1137 = vmatpush1.msra.mxu0 0.0
        %1138 = vmatprep.subr.mxu0 0.0
        %1139 = vmatpush1.msra.mxu0 0.0
        %1140 = vmatprep.subr.mxu0 0.0
        %1141 = vmatpush1.msra.mxu0 0.0
        %1142 = vmatprep.subr.mxu0 0.0
        %1143 = vmatpush1.msra.mxu0 0.0
        %1144 = vmatprep.subr.mxu0 0.0
        %1145 = vmatpush1.msra.mxu0 0.0
        %1146 = vmatprep.subr.mxu0 0.0
        %1147 = vmatpush1.msra.mxu0 0.0
        %1148 = vmatprep.subr.mxu0 0.0
        %1149 = vmatpush1.msra.mxu0 0.0
        %1150 = vmatprep.subr.mxu0 0.0
        %1151 = vmatpush1.msra.mxu0 0.0
        %1152 = vmatprep.subr.mxu0 0.0
        %1153 = vmatpush1.msra.mxu0 0.0
        %1154 = vmatprep.subr.mxu0 0.0
        %1155 = vmatpush1.msra.mxu0 0.0
        %1156 = vmatprep.subr.mxu0 0.0
        %1157 = vmatpush1.msra.mxu0 0.0
        %1158 = vmatprep.subr.mxu0 0.0
        %1159 = vmatpush1.msra.mxu0 0.0
        %1160 = vmatprep.subr.mxu0 0.0
        %1161 = vmatpush1.msra.mxu0 0.0
        %1162 = vmatprep.subr.mxu0 0.0
        %1163 = vmatpush1.msra.mxu0 0.0
        %1164 = vmatprep.subr.mxu0 0.0
        %1165 = vmatpush1.msra.mxu0 0.0
        %1166 = vmatprep.subr.mxu0 0.0
        %1167 = vmatpush1.msra.mxu0 0.0
        %1168 = vmatprep.subr.mxu0 0.0
        %1169 = vmatpush1.msra.mxu0 0.0
        %1170 = vmatprep.subr.mxu0 0.0
        %1171 = vmatpush1.msra.mxu0 0.0
        %1172 = vmatprep.subr.mxu0 0.0
        %1173 = vmatpush1.msra.mxu0 0.0
        %1174 = vmatprep.subr.mxu0 0.0
        %1175 = vmatpush1.msra.mxu0 0.0
        %1176 = vmatprep.subr.mxu0 0.0
        %1177 = vmatpush1.msra.mxu0 0.0
        %1178 = vmatprep.subr.mxu0 0.0
        %1179 = vmatpush1.msra.mxu0 0.0
        %1180 = vmatprep.subr.mxu0 0.0
        %1181 = vmatpush1.msra.mxu0 0.0
        %1182 = vmatprep.subr.mxu0 0.0
        %1183 = vmatpush1.msra.mxu0 0.0
        %1184 = vmatprep.subr.mxu0 0.0
        %1185 = vmatpush1.msra.mxu0 0.0
        %1186 = vmatprep.subr.mxu0 0.0
        %1187 = vmatpush1.msra.mxu0 0.0
        %1188 = vmatprep.subr.mxu0 0.0
        %1189 = vmatpush1.msra.mxu0 0.0
        %1190 = vmatprep.subr.mxu0 0.0
        %1191 = vmatpush1.msra.mxu0 0.0
        %1192 = vmatprep.subr.mxu0 0.0
        %1193 = vmatpush1.msra.mxu0 0.0
        %1194 = vmatprep.mubr.f32.mxu0 0.0
        %v1195 = vand.u32 %v912, 4294901760
        %v1196 = vsub.f32 %v912, %v1195
        %1197 = vmatmul.mubr.f32.gmra.mrb[0].mxu0 %v1196
        %v1198 = vpop.f32.mrb[0].mxu0
        %v1199 = vadd.f32 %v1105, %v1198
        %v1200 = vpop.f32.mrb[0].mxu0
        %1201 = vmatprep.mubr.f32.mxu0 0.0
        %v1202 = vand.u32 %v914, 4294901760
        %v1203 = vsub.f32 %v914, %v1202
        %1204 = vmatmul.mubr.f32.gmra.mrb[0].mxu0 %v1203
        %v1205 = vpop.f32.mrb[0].mxu0
        %v1206 = vadd.f32 %v1111, %v1205
        %v1207 = vpop.f32.mrb[0].mxu0
        %1208 = vmatprep.mubr.f32.mxu0 0.0
        %v1209 = vand.u32 %v916, 4294901760
        %v1210 = vsub.f32 %v916, %v1209
        %1211 = vmatmul.mubr.f32.gmra.mrb[0].mxu0 %v1210
        %v1212 = vpop.f32.mrb[0].mxu0
        %v1213 = vadd.f32 %v1117, %v1212
        %v1214 = vpop.f32.mrb[0].mxu0
        %1215 = vmatprep.mubr.f32.mxu0 0.0
        %v1216 = vand.u32 %v918, 4294901760
        %v1217 = vsub.f32 %v918, %v1216
        %1218 = vmatmul.mubr.f32.gmra.mrb[0].mxu0 %v1217
        %v1219 = vpop.f32.mrb[0].mxu0
        %v1220 = vadd.f32 %v1123, %v1219
        %v1221 = vpop.f32.mrb[0].mxu0
        %1222 = vdwg.mxu0
        %1223 = vmatprep.subr.mxu0 0.0
        %v1224 = vand.u32 %v297, 4294901760
        %1225 = vmatpush1.msra.mxu0 %v1224
        %1226 = vmatprep.subr.mxu0 0.0
        %v1227 = vand.u32 %v298, 4294901760
        %1228 = vmatpush1.msra.mxu0 %v1227
        %1229 = vmatprep.subr.mxu0 0.0
        %1230 = vmatpush1.msra.mxu0 0.0
        %1231 = vmatprep.subr.mxu0 0.0
        %1232 = vmatpush1.msra.mxu0 0.0
        %1233 = vmatprep.subr.mxu0 0.0
        %1234 = vmatpush1.msra.mxu0 0.0
        %1235 = vmatprep.subr.mxu0 0.0
        %1236 = vmatpush1.msra.mxu0 0.0
        %1237 = vmatprep.subr.mxu0 0.0
        %1238 = vmatpush1.msra.mxu0 0.0
        %1239 = vmatprep.subr.mxu0 0.0
        %1240 = vmatpush1.msra.mxu0 0.0
        %1241 = vmatprep.subr.mxu0 0.0
        %1242 = vmatpush1.msra.mxu0 0.0
        %1243 = vmatprep.subr.mxu0 0.0
        %1244 = vmatpush1.msra.mxu0 0.0
        %1245 = vmatprep.subr.mxu0 0.0
        %1246 = vmatpush1.msra.mxu0 0.0
        %1247 = vmatprep.subr.mxu0 0.0
        %1248 = vmatpush1.msra.mxu0 0.0
        %1249 = vmatprep.subr.mxu0 0.0
        %1250 = vmatpush1.msra.mxu0 0.0
        %1251 = vmatprep.subr.mxu0 0.0
        %1252 = vmatpush1.msra.mxu0 0.0
        %1253 = vmatprep.subr.mxu0 0.0
        %1254 = vmatpush1.msra.mxu0 0.0
        %1255 = vmatprep.subr.mxu0 0.0
        %1256 = vmatpush1.msra.mxu0 0.0
        %1257 = vmatprep.subr.mxu0 0.0
        %1258 = vmatpush1.msra.mxu0 0.0
        %1259 = vmatprep.subr.mxu0 0.0
        %1260 = vmatpush1.msra.mxu0 0.0
        %1261 = vmatprep.subr.mxu0 0.0
        %1262 = vmatpush1.msra.mxu0 0.0
        %1263 = vmatprep.subr.mxu0 0.0
        %1264 = vmatpush1.msra.mxu0 0.0
        %1265 = vmatprep.subr.mxu0 0.0
        %1266 = vmatpush1.msra.mxu0 0.0
        %1267 = vmatprep.subr.mxu0 0.0
        %1268 = vmatpush1.msra.mxu0 0.0
        %1269 = vmatprep.subr.mxu0 0.0
        %1270 = vmatpush1.msra.mxu0 0.0
        %1271 = vmatprep.subr.mxu0 0.0
        %1272 = vmatpush1.msra.mxu0 0.0
        %1273 = vmatprep.subr.mxu0 0.0
        %1274 = vmatpush1.msra.mxu0 0.0
        %1275 = vmatprep.subr.mxu0 0.0
        %1276 = vmatpush1.msra.mxu0 0.0
        %1277 = vmatprep.subr.mxu0 0.0
        %1278 = vmatpush1.msra.mxu0 0.0
        %1279 = vmatprep.subr.mxu0 0.0
        %1280 = vmatpush1.msra.mxu0 0.0
        %1281 = vmatprep.subr.mxu0 0.0
        %1282 = vmatpush1.msra.mxu0 0.0
        %1283 = vmatprep.subr.mxu0 0.0
        %1284 = vmatpush1.msra.mxu0 0.0
        %1285 = vmatprep.subr.mxu0 0.0
        %1286 = vmatpush1.msra.mxu0 0.0
        %1287 = vmatprep.subr.mxu0 0.0
        %1288 = vmatpush1.msra.mxu0 0.0
        %1289 = vmatprep.mubr.f32.mxu0 0.0
        %v1290 = vand.u32 %v912, 4294901760
        %v1291 = vsub.f32 %v912, %v1290
        %v1292 = vand.u32 %v1291, 4294901760
        %1293 = vmatmul.mubr.f32.gmra.mrb[0].mxu0 %v1292
        %v1294 = vpop.f32.mrb[0].mxu0
        %v1295 = vadd.f32 %v1199, %v1294
        %v1296 = vpop.f32.mrb[0].mxu0
        %1297 = vmatprep.mubr.f32.mxu0 0.0
        %v1298 = vand.u32 %v914, 4294901760
        %v1299 = vsub.f32 %v914, %v1298
        %v1300 = vand.u32 %v1299, 4294901760
        %1301 = vmatmul.mubr.f32.gmra.mrb[0].mxu0 %v1300
        %v1302 = vpop.f32.mrb[0].mxu0
        %v1303 = vadd.f32 %v1206, %v1302
        %v1304 = vpop.f32.mrb[0].mxu0
        %1305 = vmatprep.mubr.f32.mxu0 0.0
        %v1306 = vand.u32 %v916, 4294901760
        %v1307 = vsub.f32 %v916, %v1306
        %v1308 = vand.u32 %v1307, 4294901760
        %1309 = vmatmul.mubr.f32.gmra.mrb[0].mxu0 %v1308
        %v1310 = vpop.f32.mrb[0].mxu0
        %v1311 = vadd.f32 %v1213, %v1310
        %v1312 = vpop.f32.mrb[0].mxu0
        %1313 = vmatprep.mubr.f32.mxu0 0.0
        %v1314 = vand.u32 %v918, 4294901760
        %v1315 = vsub.f32 %v918, %v1314
        %v1316 = vand.u32 %v1315, 4294901760
        %1317 = vmatmul.mubr.f32.gmra.mrb[0].mxu0 %v1316
        %v1318 = vpop.f32.mrb[0].mxu0
        %v1319 = vadd.f32 %v1220, %v1318
        %v1320 = vpop.f32.mrb[0].mxu0
        %1321 = vdwg.mxu0
        %1322 = vmatprep.subr.mxu0 0.0
        %v1323 = vand.u32 %v297, 4294901760
        %v1324 = vsub.f32 %v297, %v1323
        %v1325 = vand.u32 %v1324, 4294901760
        %1326 = vmatpush1.msra.mxu0 %v1325
        %1327 = vmatprep.subr.mxu0 0.0
        %v1328 = vand.u32 %v298, 4294901760
        %v1329 = vsub.f32 %v298, %v1328
        %v1330 = vand.u32 %v1329, 4294901760
        %1331 = vmatpush1.msra.mxu0 %v1330
        %1332 = vmatprep.subr.mxu0 0.0
        %1333 = vmatpush1.msra.mxu0 0.0
        %1334 = vmatprep.subr.mxu0 0.0
        %1335 = vmatpush1.msra.mxu0 0.0
        %1336 = vmatprep.subr.mxu0 0.0
        %1337 = vmatpush1.msra.mxu0 0.0
        %1338 = vmatprep.subr.mxu0 0.0
        %1339 = vmatpush1.msra.mxu0 0.0
        %1340 = vmatprep.subr.mxu0 0.0
        %1341 = vmatpush1.msra.mxu0 0.0
        %1342 = vmatprep.subr.mxu0 0.0
        %1343 = vmatpush1.msra.mxu0 0.0
        %1344 = vmatprep.subr.mxu0 0.0
        %1345 = vmatpush1.msra.mxu0 0.0
        %1346 = vmatprep.subr.mxu0 0.0
        %1347 = vmatpush1.msra.mxu0 0.0
        %1348 = vmatprep.subr.mxu0 0.0
        %1349 = vmatpush1.msra.mxu0 0.0
        %1350 = vmatprep.subr.mxu0 0.0
        %1351 = vmatpush1.msra.mxu0 0.0
        %1352 = vmatprep.subr.mxu0 0.0
        %1353 = vmatpush1.msra.mxu0 0.0
        %1354 = vmatprep.subr.mxu0 0.0
        %1355 = vmatpush1.msra.mxu0 0.0
        %1356 = vmatprep.subr.mxu0 0.0
        %1357 = vmatpush1.msra.mxu0 0.0
        %1358 = vmatprep.subr.mxu0 0.0
        %1359 = vmatpush1.msra.mxu0 0.0
        %1360 = vmatprep.subr.mxu0 0.0
        %1361 = vmatpush1.msra.mxu0 0.0
        %1362 = vmatprep.subr.mxu0 0.0
        %1363 = vmatpush1.msra.mxu0 0.0
        %1364 = vmatprep.subr.mxu0 0.0
        %1365 = vmatpush1.msra.mxu0 0.0
        %1366 = vmatprep.subr.mxu0 0.0
        %1367 = vmatpush1.msra.mxu0 0.0
        %1368 = vmatprep.subr.mxu0 0.0
        %1369 = vmatpush1.msra.mxu0 0.0
        %1370 = vmatprep.subr.mxu0 0.0
        %1371 = vmatpush1.msra.mxu0 0.0
        %1372 = vmatprep.subr.mxu0 0.0
        %1373 = vmatpush1.msra.mxu0 0.0
        %1374 = vmatprep.subr.mxu0 0.0
        %1375 = vmatpush1.msra.mxu0 0.0
        %1376 = vmatprep.subr.mxu0 0.0
        %1377 = vmatpush1.msra.mxu0 0.0
        %1378 = vmatprep.subr.mxu0 0.0
        %1379 = vmatpush1.msra.mxu0 0.0
        %1380 = vmatprep.subr.mxu0 0.0
        %1381 = vmatpush1.msra.mxu0 0.0
        %1382 = vmatprep.subr.mxu0 0.0
        %1383 = vmatpush1.msra.mxu0 0.0
        %1384 = vmatprep.subr.mxu0 0.0
        %1385 = vmatpush1.msra.mxu0 0.0
        %1386 = vmatprep.subr.mxu0 0.0
        %1387 = vmatpush1.msra.mxu0 0.0
        %1388 = vmatprep.subr.mxu0 0.0
        %1389 = vmatpush1.msra.mxu0 0.0
        %1390 = vmatprep.subr.mxu0 0.0
        %1391 = vmatpush1.msra.mxu0 0.0
        %1392 = vmatprep.mubr.f32.mxu0 0.0
        %v1393 = vand.u32 %v912, 4294901760
        %1394 = vmatmul.mubr.f32.gmra.mrb[0].mxu0 %v1393
        %v1395 = vpop.f32.mrb[0].mxu0
        %v1396 = vadd.f32 %v1295, %v1395
        %v1397 = vpop.f32.mrb[0].mxu0
        %1398 = vmatprep.mubr.f32.mxu0 0.0
        %v1399 = vand.u32 %v914, 4294901760
        %1400 = vmatmul.mubr.f32.gmra.mrb[0].mxu0 %v1399
        %v1401 = vpop.f32.mrb[0].mxu0
        %v1402 = vadd.f32 %v1303, %v1401
        %v1403 = vpop.f32.mrb[0].mxu0
        %1404 = vmatprep.mubr.f32.mxu0 0.0
        %v1405 = vand.u32 %v916, 4294901760
        %1406 = vmatmul.mubr.f32.gmra.mrb[0].mxu0 %v1405
        %v1407 = vpop.f32.mrb[0].mxu0
        %v1408 = vadd.f32 %v1311, %v1407
        %v1409 = vpop.f32.mrb[0].mxu0
        %1410 = vmatprep.mubr.f32.mxu0 0.0
        %v1411 = vand.u32 %v918, 4294901760
        %1412 = vmatmul.mubr.f32.gmra.mrb[0].mxu0 %v1411
        %v1413 = vpop.f32.mrb[0].mxu0
        %v1414 = vadd.f32 %v1319, %v1413
        %v1415 = vpop.f32.mrb[0].mxu0
        %1416 = vdwg.mxu0
        %1417 = vmatprep.subr.mxu0 0.0
        %v1418 = vand.u32 %v297, 4294901760
        %1419 = vmatpush1.msra.mxu0 %v1418
        %1420 = vmatprep.subr.mxu0 0.0
        %v1421 = vand.u32 %v298, 4294901760
        %1422 = vmatpush1.msra.mxu0 %v1421
        %1423 = vmatprep.subr.mxu0 0.0
        %1424 = vmatpush1.msra.mxu0 0.0
        %1425 = vmatprep.subr.mxu0 0.0
        %1426 = vmatpush1.msra.mxu0 0.0
        %1427 = vmatprep.subr.mxu0 0.0
        %1428 = vmatpush1.msra.mxu0 0.0
        %1429 = vmatprep.subr.mxu0 0.0
        %1430 = vmatpush1.msra.mxu0 0.0
        %1431 = vmatprep.subr.mxu0 0.0
        %1432 = vmatpush1.msra.mxu0 0.0
        %1433 = vmatprep.subr.mxu0 0.0
        %1434 = vmatpush1.msra.mxu0 0.0
        %1435 = vmatprep.subr.mxu0 0.0
        %1436 = vmatpush1.msra.mxu0 0.0
        %1437 = vmatprep.subr.mxu0 0.0
        %1438 = vmatpush1.msra.mxu0 0.0
        %1439 = vmatprep.subr.mxu0 0.0
        %1440 = vmatpush1.msra.mxu0 0.0
        %1441 = vmatprep.subr.mxu0 0.0
        %1442 = vmatpush1.msra.mxu0 0.0
        %1443 = vmatprep.subr.mxu0 0.0
        %1444 = vmatpush1.msra.mxu0 0.0
        %1445 = vmatprep.subr.mxu0 0.0
        %1446 = vmatpush1.msra.mxu0 0.0
        %1447 = vmatprep.subr.mxu0 0.0
        %1448 = vmatpush1.msra.mxu0 0.0
        %1449 = vmatprep.subr.mxu0 0.0
        %1450 = vmatpush1.msra.mxu0 0.0
        %1451 = vmatprep.subr.mxu0 0.0
        %1452 = vmatpush1.msra.mxu0 0.0
        %1453 = vmatprep.subr.mxu0 0.0
        %1454 = vmatpush1.msra.mxu0 0.0
        %1455 = vmatprep.subr.mxu0 0.0
        %1456 = vmatpush1.msra.mxu0 0.0
        %1457 = vmatprep.subr.mxu0 0.0
        %1458 = vmatpush1.msra.mxu0 0.0
        %1459 = vmatprep.subr.mxu0 0.0
        %1460 = vmatpush1.msra.mxu0 0.0
        %1461 = vmatprep.subr.mxu0 0.0
        %1462 = vmatpush1.msra.mxu0 0.0
        %1463 = vmatprep.subr.mxu0 0.0
        %1464 = vmatpush1.msra.mxu0 0.0
        %1465 = vmatprep.subr.mxu0 0.0
        %1466 = vmatpush1.msra.mxu0 0.0
        %1467 = vmatprep.subr.mxu0 0.0
        %1468 = vmatpush1.msra.mxu0 0.0
        %1469 = vmatprep.subr.mxu0 0.0
        %1470 = vmatpush1.msra.mxu0 0.0
        %1471 = vmatprep.subr.mxu0 0.0
        %1472 = vmatpush1.msra.mxu0 0.0
        %1473 = vmatprep.subr.mxu0 0.0
        %1474 = vmatpush1.msra.mxu0 0.0
        %1475 = vmatprep.subr.mxu0 0.0
        %1476 = vmatpush1.msra.mxu0 0.0
        %1477 = vmatprep.subr.mxu0 0.0
        %1478 = vmatpush1.msra.mxu0 0.0
        %1479 = vmatprep.subr.mxu0 0.0
        %1480 = vmatpush1.msra.mxu0 0.0
        %1481 = vmatprep.subr.mxu0 0.0
        %1482 = vmatpush1.msra.mxu0 0.0
        %1483 = vmatprep.mubr.f32.mxu0 0.0
        %v1484 = vand.u32 %v912, 4294901760
        %1485 = vmatmul.mubr.f32.gmra.mrb[0].mxu0 %v1484
        %v1486 = vpop.f32.mrb[0].mxu0
        %v1487 = vadd.f32 %v1396, %v1486
        %v1488 = vpop.f32.mrb[0].mxu0
        %1489 = vmatprep.mubr.f32.mxu0 0.0
        %v1490 = vand.u32 %v914, 4294901760
        %1491 = vmatmul.mubr.f32.gmra.mrb[0].mxu0 %v1490
        %v1492 = vpop.f32.mrb[0].mxu0
        %v1493 = vadd.f32 %v1402, %v1492
        %v1494 = vpop.f32.mrb[0].mxu0
        %1495 = vmatprep.mubr.f32.mxu0 0.0
        %v1496 = vand.u32 %v916, 4294901760
        %1497 = vmatmul.mubr.f32.gmra.mrb[0].mxu0 %v1496
        %v1498 = vpop.f32.mrb[0].mxu0
        %v1499 = vadd.f32 %v1408, %v1498
        %v1500 = vpop.f32.mrb[0].mxu0
        %1501 = vmatprep.mubr.f32.mxu0 0.0
        %v1502 = vand.u32 %v918, 4294901760
        %1503 = vmatmul.mubr.f32.gmra.mrb[0].mxu0 %v1502
        %v1504 = vpop.f32.mrb[0].mxu0
        %v1505 = vadd.f32 %v1414, %v1504
        %v1506 = vpop.f32.mrb[0].mxu0
        %1507 = vdwg.mxu0
        %vm1508 = vcmask 64512
        %1509 = vst.msk [vmem:[%s225] sm:$0xff] %vm1508, %v879
        %1510 = vst.msk [vmem:[%s225 + $0x8] sm:$0xff] %vm1508, %v885
        %1511 = vst.msk [vmem:[%s225 + $0x10] sm:$0xff] %vm1508, %v891
        %1512 = vst.msk [vmem:[%s225 + $0x18] sm:$0xff] %vm1508, %v897
        %1517 = vrot.lane.b32.xlu0 %v879, 120
        %v1518 = vpop.permute.xlu0 %1517
        %1519 = vrot.lane.b32.xlu0 %v885, 120
        %v1520 = vpop.permute.xlu0 %1519
        %1521 = vrot.lane.b32.xlu0 %v891, 120
        %v1522 = vpop.permute.xlu0 %1521
        %1523 = vrot.lane.b32.xlu0 %v897, 120
        %v1524 = vpop.permute.xlu0 %1523
        %1529 = vst.msk [vmem:[%s232] sm:$0xff] %vm1508, %v1518
        %1530 = vst.msk [vmem:[%s232 + $0x8] sm:$0xff] %vm1508, %v1520
        %1531 = vst.msk [vmem:[%s232 + $0x10] sm:$0xff] %vm1508, %v1522
        %1532 = vst.msk [vmem:[%s232 + $0x18] sm:$0xff] %vm1508, %v1524
        %1533 = vst.msk [vmem:[%s239] sm:$0xff] %vm1508, %v1487
        %1534 = vst.msk [vmem:[%s239 + $0x8] sm:$0xff] %vm1508, %v1493
        %1535 = vst.msk [vmem:[%s239 + $0x10] sm:$0xff] %vm1508, %v1499
        %1536 = vst.msk [vmem:[%s239 + $0x18] sm:$0xff] %vm1508, %v1505
        %1541 = vrot.lane.b32.xlu0 %v1487, 120
        %v1542 = vpop.permute.xlu0 %1541
        %1543 = vrot.lane.b32.xlu0 %v1493, 120
        %v1544 = vpop.permute.xlu0 %1543
        %1545 = vrot.lane.b32.xlu0 %v1499, 120
        %v1546 = vpop.permute.xlu0 %1545
        %1547 = vrot.lane.b32.xlu0 %v1505, 120
        %v1548 = vpop.permute.xlu0 %1547
        %1553 = vst.msk [vmem:[%s246] sm:$0xff] %vm1508, %v1542
        %1554 = vst.msk [vmem:[%s246 + $0x8] sm:$0xff] %vm1508, %v1544
        %1555 = vst.msk [vmem:[%s246 + $0x10] sm:$0xff] %vm1508, %v1546
        %1556 = vst.msk [vmem:[%s246 + $0x18] sm:$0xff] %vm1508, %v1548
        %s1557 = sand.u32 %s81, 1
        %s1558 = scalar_lea.sflag [#allocation3], %s1557
        %s1559 = sand.u32 %s81, 1
        %s1560 = smul.addr %s1559, 32
        %s1561 = scalar_lea.vmem [#allocation2], %s1560
        %s1562 = sand.u32 %s26, 1
        %s1563 = scalar_lea.sflag [#allocation5], %s1562
        %s1564 = sand.u32 %s107, 1
        %s1565 = smul.addr %s1564, 32
        %s1566 = scalar_lea.vmem [#allocation4], %s1565
        %s1567 = sand.u32 %s26, 1
        %s1568 = scalar_lea.sflag [#allocation5], %s1567
        %s1569 = sand.u32 %s133, 1
        %s1570 = smul.addr %s1569, 32
        %s1571 = scalar_lea.vmem [#allocation6], %s1570
        %s1572 = sand.u32 %s159, 1
        %s1573 = scalar_lea.sflag [#allocation8], %s1572
        %s1574 = sand.u32 %s159, 1
        %s1575 = smul.addr %s1574, 32
        %s1576 = scalar_lea.vmem [#allocation7], %s1575
        // Predicated region
        $region29: #{wavepool2.1} parent=27 // pred_check
          %p1577 = pneg %p91
        $region30: #{wavepool2.1} parent=27 // pred_check_branch
          %1579 = sbr.rel (%p1577) target = $region32
        $region31: #{wavepool2.1} parent=27 // pred_region
          %s1580 = smul.u32 4, %s26
          %s1582 = ssub.s32 512, 512
          %1583 = vsyncadd %s1558, %s1582
          %s1584 = smul.addr %s1580, 128
          %s1585 = scalar_lea.hbm %s2, %s1584
          %s1586 = sshll.u32 %s1561, 4
          %s1587 = int_to_ptr.vmem [resolvable:$true] %s1586
          %1592 = dma.vmem_to_hbm [thread:$0]  %s1587, 512, %s1585, %s1558, 128, 128, 8
        $region32: #{wavepool2.1} parent=27 // pred_fallthru
          _
        // Predicated region
        $region33: #{wavepool2.1} parent=27 // pred_check
          %p1593 = pneg %p117
        $region34: #{wavepool2.1} parent=27 // pred_check_branch
          %1595 = sbr.rel (%p1593) target = $region36
        $region35: #{wavepool2.1} parent=27 // pred_region
          %s1596 = smul.u32 4, %s26
          %s1598 = ssub.s32 512, 512
          %1599 = vsyncadd %s1563, %s1598
          %s1600 = smul.addr %s1596, 128
          %s1601 = scalar_lea.hbm %s3, %s1600
          %s1602 = sshll.u32 %s1566, 4
          %s1603 = int_to_ptr.vmem [resolvable:$true] %s1602
          %1608 = dma.vmem_to_hbm [thread:$0]  %s1603, 512, %s1601, %s1563, 128, 128, 8
        $region36: #{wavepool2.1} parent=27 // pred_fallthru
          _
        // Predicated region
        $region37: #{wavepool2.1} parent=27 // pred_check
          %p1609 = pneg %p143
        $region38: #{wavepool2.1} parent=27 // pred_check_branch
          %1611 = sbr.rel (%p1609) target = $region40
        $region39: #{wavepool2.1} parent=27 // pred_region
          %s1612 = smul.u32 4, %s26
          %s1614 = ssub.s32 512, 512
          %1615 = vsyncadd %s1568, %s1614
          %s1616 = smul.addr %s1612, 128
          %s1617 = scalar_lea.hbm %s4, %s1616
          %s1618 = sshll.u32 %s1571, 4
          %s1619 = int_to_ptr.vmem [resolvable:$true] %s1618
          %1624 = dma.vmem_to_hbm [thread:$0]  %s1619, 512, %s1617, %s1568, 128, 128, 8
        $region40: #{wavepool2.1} parent=27 // pred_fallthru
          _
        // Predicated region
        $region41: #{wavepool2.1} parent=27 // pred_check
          %p1625 = pneg %p169
        $region42: #{wavepool2.1} parent=27 // pred_check_branch
          %1627 = sbr.rel (%p1625) target = $region44
        $region43: #{wavepool2.1} parent=27 // pred_region
          %s1628 = smul.u32 4, %s26
          %s1630 = ssub.s32 512, 512
          %1631 = vsyncadd %s1573, %s1630
          %s1632 = smul.addr %s1628, 128
          %s1633 = scalar_lea.hbm %s5, %s1632
          %s1634 = sshll.u32 %s1576, 4
          %s1635 = int_to_ptr.vmem [resolvable:$true] %s1634
          %1640 = dma.vmem_to_hbm [thread:$0]  %s1635, 512, %s1633, %s1573, 128, 128, 8
        $region44: #{wavepool2.1} parent=27 // pred_fallthru
          _
      $region28: #{wavepool2.1} parent=5 // pred_fallthru
        _
      %p1641 = scmp.le.s32.totalorder 2, %s21
      // Predicated region
      $region45: #{wavepool2.1} parent=5 // pred_check
        %p1642 = pneg %p1641
      $region46: #{wavepool2.1} parent=5 // pred_check_branch
        %1644 = sbr.rel (%p1642) target = $region48
      $region47: #{wavepool2.1} parent=5 // pred_region
        %s1645 = ssub.s32 %s21, 2
        // Predicated region
        $region49: #{wavepool2.1} parent=47 // pred_check
          %p1646 = pneg %p97
        $region50: #{wavepool2.1} parent=47 // pred_check_branch
          %1648 = sbr.rel (%p1646) target = $region52
        $region51: #{wavepool2.1} parent=47 // pred_region
          %s1649 = sand.u32 %s82, 1
          %s1650 = scalar_lea.sflag [#allocation3], %s1649
          %s1651 = sand.u32 %s82, 1
          %s1652 = smul.addr %s1651, 32
          %s1653 = scalar_lea.vmem [#allocation2], %s1652
          %1654 = dma.done %s1650, 512
        $region52: #{wavepool2.1} parent=47 // pred_fallthru
          _
        // Predicated region
        $region53: #{wavepool2.1} parent=47 // pred_check
          %p1655 = pneg %p123
        $region54: #{wavepool2.1} parent=47 // pred_check_branch
          %1657 = sbr.rel (%p1655) target = $region56
        $region55: #{wavepool2.1} parent=47 // pred_region
          %s1658 = sand.u32 %s27, 1
          %s1659 = scalar_lea.sflag [#allocation5], %s1658
          %s1660 = sand.u32 %s108, 1
          %s1661 = smul.addr %s1660, 32
          %s1662 = scalar_lea.vmem [#allocation4], %s1661
          %1663 = dma.done %s1659, 512
        $region56: #{wavepool2.1} parent=47 // pred_fallthru
          _
        // Predicated region
        $region57: #{wavepool2.1} parent=47 // pred_check
          %p1664 = pneg %p149
        $region58: #{wavepool2.1} parent=47 // pred_check_branch
          %1666 = sbr.rel (%p1664) target = $region60
        $region59: #{wavepool2.1} parent=47 // pred_region
          %s1667 = sand.u32 %s27, 1
          %s1668 = scalar_lea.sflag [#allocation5], %s1667
          %s1669 = sand.u32 %s134, 1
          %s1670 = smul.addr %s1669, 32
          %s1671 = scalar_lea.vmem [#allocation6], %s1670
          %1672 = dma.done %s1668, 512
        $region60: #{wavepool2.1} parent=47 // pred_fallthru
          _
        // Predicated region
        $region61: #{wavepool2.1} parent=47 // pred_check
          %p1673 = pneg %p175
        $region62: #{wavepool2.1} parent=47 // pred_check_branch
          %1675 = sbr.rel (%p1673) target = $region64
        $region63: #{wavepool2.1} parent=47 // pred_region
          %s1676 = sand.u32 %s160, 1
          %s1677 = scalar_lea.sflag [#allocation8], %s1676
          %s1678 = sand.u32 %s160, 1
          %s1679 = smul.addr %s1678, 32
          %s1680 = scalar_lea.vmem [#allocation7], %s1679
          %1681 = dma.done %s1677, 512
        $region64: #{wavepool2.1} parent=47 // pred_fallthru
          _
      $region48: #{wavepool2.1} parent=5 // pred_fallthru
        _
    $region6: #{wavepool2.1} parent=1 // loop_footer
      %s25 = sadd.s32 1, %s21
    $region7: #{wavepool2.1} parent=1 // loop_footer_branch
      %20 = sbr.rel target = $region3
    $region8: #{wavepool2.1} parent=1 // loop_exit
      _
    %1682 = vsyncpa [#allocation3], 1
    %s1683 = scalar_lea.sflag [#allocation3], 1
    %1684 = vsyncpa %s1683, 1
    %1685 = vsyncpa [#allocation5], 1
    %s1686 = scalar_lea.sflag [#allocation5], 1
    %1687 = vsyncpa %s1686, 1
    %1688 = vsyncpa [#allocation8], 1
    %s1689 = scalar_lea.sflag [#allocation8], 1
    %1690 = vsyncpa %s1689, 1

</llo_original>
